<compile_context>
chip_gen: v7x
topology: tpu7x:2x2x1
jax: 0.10.0
libtpu: 0.0.40
codegen_flags: <defaults>
</compile_context>

<pallas_src>
import functools

import numpy as np
import jax
import jax.numpy as jnp
from jax import lax
from jax.experimental import pallas as pl
from jax.experimental.pallas import tpu as pltpu

BN_EPS = 1e-5


def dcn_kernel(idx_ref,              # (bt, F)        int32  global (offset) indices
               emb_ref,              # (T_pad, D_pad) f32    block-diagonal expanded table
               wc_ref, bc_ref,       # (L, D_pad), (L, D_pad) cross weights / biases
               w1_ref, b1_ref,       # (D_pad, H1p), (1, H1p) MLP layer 1 (BN folded)
               w2_ref, b2_ref,       # (H1p, H2p), (1, H2p)   MLP layer 2 (BN folded)
               wlc_ref, wld_ref,     # (1, D_pad), (1, H2p)   final linear split
               blin_ref,             # (1, 1)                 final linear bias
               out_ref,              # (1, bt)
               *, num_cross_layers):
    bt, num_fields = idx_ref.shape
    t_pad = emb_ref.shape[0]

    # --- in-kernel embedding gather + per-field concat via one-hot matmul (MXU) ---
    gidx = idx_ref[...]                                            # (bt, F) int32
    col = lax.broadcasted_iota(jnp.int32, (bt, t_pad), 1)          # column ids
    onehot = (col == gidx[:, 0:1]).astype(jnp.float32)
    for f in range(1, num_fields):
        onehot = onehot + (col == gidx[:, f:f + 1]).astype(jnp.float32)
    # Fields occupy disjoint global-index ranges, and the expanded table is
    # block-diagonal, so one matmul yields the concatenated (bt, F*E) embedding.
    x0 = jnp.dot(onehot, emb_ref[...], preferred_element_type=jnp.float32)  # (bt, D_pad)

    # --- Deep branch: (Linear -> eval-BN folded -> ReLU) x2 ---
    h = jnp.dot(x0, w1_ref[...], preferred_element_type=jnp.float32) + b1_ref[...]
    h = jnp.maximum(h, 0.0)
    h = jnp.dot(h, w2_ref[...], preferred_element_type=jnp.float32) + b2_ref[...]
    h = jnp.maximum(h, 0.0)                                                  # (bt, H2p)

    # --- Cross network: x_{l+1} = x0 * (x_l . w_l) + b_l + x_l  (static unroll) ---
    xl = x0
    for l in range(num_cross_layers):
        w_l = wc_ref[l:l + 1, :]                                   # (1, D_pad)
        b_l = bc_ref[l:l + 1, :]                                   # (1, D_pad)
        xw = jnp.sum(xl * w_l, axis=-1, keepdims=True)             # (bt, 1)
        xl = x0 * xw + b_l + xl

    # --- Final Linear(concat([cross, deep])) without materializing the concat.
    # NT dot_generals produce a lane-dense (1, bt) row directly.
    dn = (((1,), (1,)), ((), ()))
    p = (lax.dot_general(wlc_ref[...], xl, dn, preferred_element_type=jnp.float32)
         + lax.dot_general(wld_ref[...], h, dn, preferred_element_type=jnp.float32)
         + blin_ref[...])                                          # (1, bt)
    out_ref[...] = jax.nn.sigmoid(p)


def init_params(key, field_dims, embed_dim, num_layers, mlp_dims):
    """Synthetic params with torch-equivalent shapes (dense weights stored (in, out))."""
    F = len(field_dims)
    D = embed_dim * F
    h1, h2 = mlp_dims
    total = sum(field_dims)
    ks = jax.random.split(key, 16)
    return {
        "emb": jax.random.normal(ks[0], (total, embed_dim), jnp.float32) * 0.1,
        "w_cross": jax.random.normal(ks[1], (num_layers, D), jnp.float32) * 0.1,
        "b_cross": jax.random.normal(ks[2], (num_layers, D), jnp.float32) * 0.01,
        "w_h1": jax.random.normal(ks[3], (D, h1), jnp.float32) * 0.1,
        "b_h1": jax.random.normal(ks[4], (1, h1), jnp.float32) * 0.01,
        "g1": 1.0 + 0.1 * jax.random.normal(ks[5], (1, h1), jnp.float32),
        "be1": 0.1 * jax.random.normal(ks[6], (1, h1), jnp.float32),
        "m1": 0.1 * jax.random.normal(ks[7], (1, h1), jnp.float32),
        "v1": 1.0 + 0.1 * jax.random.uniform(ks[8], (1, h1), jnp.float32),
        "w_h2": jax.random.normal(ks[9], (h1, h2), jnp.float32) * 0.1,
        "b_h2": jax.random.normal(ks[10], (1, h2), jnp.float32) * 0.01,
        "g2": 1.0 + 0.1 * jax.random.normal(ks[11], (1, h2), jnp.float32),
        "be2": 0.1 * jax.random.normal(ks[12], (1, h2), jnp.float32),
        "m2": 0.1 * jax.random.normal(ks[13], (1, h2), jnp.float32),
        "v2": 1.0 + 0.1 * jax.random.uniform(ks[14], (1, h2), jnp.float32),
        # Final Linear(D + H2, 1): columns [0:D] act on cross output, [D:] on deep.
        "w_lin": jax.random.normal(ks[15], (1, D + h2), jnp.float32) * 0.1,
        "b_lin": jnp.zeros((1, 1), jnp.float32),
    }


def _round_up(n, m):
    return ((n + m - 1) // m) * m


def _pick_bt(b_pad, block_b):
    """Largest 128-multiple tile that divides b_pad, <= block_b, keeping >=2 tiles
    when possible (v7x megacore load balance)."""
    block_b = max(int(block_b), 128)
    m = b_pad // 128
    best = 1
    for d in range(1, m + 1):
        if m % d:
            continue
        if 128 * d > block_b:
            continue
        if m >= 2 and m // d < 2:
            continue
        best = d
    return 128 * best


@functools.partial(jax.jit, static_argnames=("field_dims", "block_b"))
def dcn_forward(x, params, field_dims, block_b=512):
    """x: int32 (B, F) per-field indices; field_dims: static tuple of ints."""
    B, F = x.shape
    E = params["emb"].shape[1]
    D = F * E
    h1 = params["w_h1"].shape[1]
    h2 = params["w_h2"].shape[1]
    L = params["w_cross"].shape[0]
    total = int(sum(field_dims))

    D_pad = _round_up(D, 128)
    h1p = _round_up(h1, 128)
    h2p = _round_up(h2, 128)
    T_pad = _round_up(total, 128)

    # --- global (offset) indices; offsets from *static* field_dims via numpy ---
    offsets = np.concatenate(([0], np.cumsum(field_dims)[:-1])).astype(np.int32)
    gidx = x.astype(jnp.int32) + jnp.asarray(offsets)[None, :]        # (B, F)

    # --- block-diagonal expanded embedding table (T_pad, D_pad): field f's rows land
    #     in columns [f*E : (f+1)*E] so one one-hot matmul gives the concatenation ---
    emb_tab = jnp.zeros((T_pad, D_pad), jnp.float32)
    for f in range(F):
        lo = int(offsets[f])
        hi = lo + int(field_dims[f])
        emb_tab = emb_tab.at[lo:hi, f * E:(f + 1) * E].set(params["emb"][lo:hi])

    # --- fold eval-mode BatchNorm into the MLP weights/biases, pad to 128 lanes ---
    s1 = params["g1"] * jax.lax.rsqrt(params["v1"] + BN_EPS)
    w1f = params["w_h1"] * s1
    b1f = (params["b_h1"] - params["m1"]) * s1 + params["be1"]
    s2 = params["g2"] * jax.lax.rsqrt(params["v2"] + BN_EPS)
    w2f = params["w_h2"] * s2
    b2f = (params["b_h2"] - params["m2"]) * s2 + params["be2"]

    w1f = jnp.pad(w1f, ((0, D_pad - D), (0, h1p - h1)))
    b1f = jnp.pad(b1f, ((0, 0), (0, h1p - h1)))
    w2f = jnp.pad(w2f, ((0, h1p - h1), (0, h2p - h2)))
    b2f = jnp.pad(b2f, ((0, 0), (0, h2p - h2)))

    w_cross = jnp.pad(params["w_cross"], ((0, 0), (0, D_pad - D)))
    b_cross = jnp.pad(params["b_cross"], ((0, 0), (0, D_pad - D)))

    # split final linear: first D columns act on cross output, rest on deep output
    wlc = jnp.pad(params["w_lin"][:, :D], ((0, 0), (0, D_pad - D)))
    wld = jnp.pad(params["w_lin"][:, D:], ((0, 0), (0, h2p - h2)))
    blin = params["b_lin"]

    # --- batch tiling / minimal padding ---
    B_pad = _round_up(B, 128)
    bt = _pick_bt(B_pad, block_b)
    if B_pad != B:
        gidx = jnp.pad(gidx, ((0, B_pad - B), (0, 0)))
    n_tiles = B_pad // bt

    kernel = functools.partial(dcn_kernel, num_cross_layers=L)

    flops = (2 * B_pad * (T_pad * D_pad + D_pad * h1p + h1p * h2p + D_pad + h2p)
             + 4 * B_pad * L * D_pad)
    bytes_accessed = 4 * (B_pad * F + B_pad + T_pad * D_pad + 2 * L * D_pad
                          + D_pad * h1p + h1p + h1p * h2p + h2p + D_pad + h2p + 1)

    out = pl.pallas_call(
        kernel,
        out_shape=jax.ShapeDtypeStruct((1, B_pad), jnp.float32),
        grid_spec=pltpu.PrefetchScalarGridSpec(
            num_scalar_prefetch=0,
            grid=(n_tiles,),
            in_specs=[
                pl.BlockSpec((bt, F), lambda i: (i, 0)),        # per-row indices (pipelined)
                pl.BlockSpec((T_pad, D_pad), lambda i: (0, 0)),  # expanded emb table (resident)
                pl.BlockSpec((L, D_pad), lambda i: (0, 0)),      # cross weights
                pl.BlockSpec((L, D_pad), lambda i: (0, 0)),      # cross biases
                pl.BlockSpec((D_pad, h1p), lambda i: (0, 0)),    # MLP-1 weight (BN folded)
                pl.BlockSpec((1, h1p), lambda i: (0, 0)),
                pl.BlockSpec((h1p, h2p), lambda i: (0, 0)),      # MLP-2 weight (BN folded)
                pl.BlockSpec((1, h2p), lambda i: (0, 0)),
                pl.BlockSpec((1, D_pad), lambda i: (0, 0)),      # final linear (cross part)
                pl.BlockSpec((1, h2p), lambda i: (0, 0)),        # final linear (deep part)
                pl.BlockSpec((1, 1), lambda i: (0, 0)),          # final linear bias
            ],
            out_specs=pl.BlockSpec((1, bt), lambda i: (0, i)),   # lane-dense output row
        ),
        compiler_params=pltpu.CompilerParams(
            dimension_semantics=("parallel",),
            vmem_limit_bytes=32 * 1024 * 1024,
        ),
        cost_estimate=pl.CostEstimate(
            flops=flops, transcendentals=B_pad, bytes_accessed=bytes_accessed),
    )(gidx, emb_tab, w_cross, b_cross, w1f, b1f, w2f, b2f, wlc, wld, blin)

    # torch: sigmoid(p.squeeze(1)) -> (B,)
    return out[0, :B]


def reference_forward(x, params, field_dims):
    """Pure-JAX reference matching the torch forward (eval mode)."""
    offsets = np.concatenate(([0], np.cumsum(field_dims)[:-1])).astype(np.int32)
    idx = x.astype(jnp.int32) + jnp.asarray(offsets)[None, :]
    B, F = x.shape
    E = params["emb"].shape[1]
    D = F * E
    embed_x = jnp.take(params["emb"], idx, axis=0).reshape(B, D)

    # MLP: (Linear -> BN(eval) -> ReLU -> Dropout(eval)) x2, no output layer
    h = embed_x @ params["w_h1"] + params["b_h1"]
    h = params["g1"] * (h - params["m1"]) / jnp.sqrt(params["v1"] + BN_EPS) + params["be1"]
    h = jnp.maximum(h, 0.0)
    h = h @ params["w_h2"] + params["b_h2"]
    h = params["g2"] * (h - params["m2"]) / jnp.sqrt(params["v2"] + BN_EPS) + params["be2"]
    h = jnp.maximum(h, 0.0)

    # CrossNetwork
    x0 = embed_x
    xl = x0
    for l in range(params["w_cross"].shape[0]):
        xw = xl @ params["w_cross"][l]                     # (B,)
        xl = x0 * xw[:, None] + params["b_cross"][l][None, :] + xl

    x_stack = jnp.concatenate([xl, h], axis=1)             # (B, D + H2)
    p = x_stack @ params["w_lin"].T + params["b_lin"]      # (B, 1)
    return jax.nn.sigmoid(p[:, 0])


if __name__ == "__main__":
    # Small, module-consistent shapes.
    field_dims = (10, 20, 30, 40)   # F = 4, sum = 100
    embed_dim = 32                  # D = F*E = 128 (lane dense)
    num_layers = 3                  # cross layers
    mlp_dims = (64, 32)
    batch = 384                     # -> B_pad = 384, bt = 128, 3 tiles, no padding waste

    key = jax.random.PRNGKey(0)
    k_param, k_x = jax.random.split(key)
    params = init_params(k_param, field_dims, embed_dim, num_layers, mlp_dims)

    # Per-field indices in [0, field_dims[f])
    maxvals = jnp.asarray(field_dims, dtype=jnp.int32)[None, :]
    x = (jax.random.randint(k_x, (batch, len(field_dims)), 0, 1_000_000,
                            dtype=jnp.int32) % maxvals).astype(jnp.int32)

    out = dcn_forward(x, params, field_dims)
    out = jax.block_until_ready(out)

    ref = reference_forward(x, params, field_dims)
    assert out.shape == (batch,), out.shape
    err = float(jnp.max(jnp.abs(out - ref)))
    assert err < 5e-4, f"max abs err {err}"

    print("KERNEL_OK")
</pallas_src>

<mosaic_0001>
module attributes {stable_mosaic.version = 11 : i64} {
  func.func @dcn_kernel(%arg0: i32, %arg1: memref<128x4xi32, #tpu.memory_space<vmem>>, %arg2: memref<128x128xf32, #tpu.memory_space<vmem>>, %arg3: memref<3x128xf32, #tpu.memory_space<vmem>>, %arg4: memref<3x128xf32, #tpu.memory_space<vmem>>, %arg5: memref<128x128xf32, #tpu.memory_space<vmem>>, %arg6: memref<1x128xf32, #tpu.memory_space<vmem>>, %arg7: memref<128x128xf32, #tpu.memory_space<vmem>>, %arg8: memref<1x128xf32, #tpu.memory_space<vmem>>, %arg9: memref<1x128xf32, #tpu.memory_space<vmem>>, %arg10: memref<1x128xf32, #tpu.memory_space<vmem>>, %arg11: memref<1x1xf32, #tpu.memory_space<vmem>>, %arg12: memref<1x128xf32, #tpu.memory_space<vmem>>) attributes {dimension_semantics = [#tpu.dimension_semantics<parallel>], iteration_bounds = array<i64: 3>, scalar_prefetch = 0 : i64, scratch_operands = 0 : i64, tpu.core_type = #tpu.core_type<tc>, window_params = [{transform_indices = @transform_0, window_bounds = array<i64: 128, 4>}, {pipeline_mode = #tpu.pipeline_mode<synchronous>, transform_indices = @transform_1, window_bounds = array<i64: 128, 128>}, {pipeline_mode = #tpu.pipeline_mode<synchronous>, transform_indices = @transform_2, window_bounds = array<i64: 3, 128>}, {pipeline_mode = #tpu.pipeline_mode<synchronous>, transform_indices = @transform_3, window_bounds = array<i64: 3, 128>}, {pipeline_mode = #tpu.pipeline_mode<synchronous>, transform_indices = @transform_4, window_bounds = array<i64: 128, 128>}, {pipeline_mode = #tpu.pipeline_mode<synchronous>, transform_indices = @transform_5, window_bounds = array<i64: 1, 128>}, {pipeline_mode = #tpu.pipeline_mode<synchronous>, transform_indices = @transform_6, window_bounds = array<i64: 128, 128>}, {pipeline_mode = #tpu.pipeline_mode<synchronous>, transform_indices = @transform_7, window_bounds = array<i64: 1, 128>}, {pipeline_mode = #tpu.pipeline_mode<synchronous>, transform_indices = @transform_8, window_bounds = array<i64: 1, 128>}, {pipeline_mode = #tpu.pipeline_mode<synchronous>, transform_indices = @transform_9, window_bounds = array<i64: 1, 128>}, {pipeline_mode = #tpu.pipeline_mode<synchronous>, transform_indices = @transform_10, window_bounds = array<i64: 1, 1>}, {transform_indices = @transform_11, window_bounds = array<i64: 1, 128>}]} {
    %c0 = arith.constant 0 : index
    %c0_0 = arith.constant 0 : index
    %0 = vector.load %arg1[%c0, %c0_0] : memref<128x4xi32, #tpu.memory_space<vmem>>, vector<128x4xi32>
    %1 = tpu.iota {dimensions = array<i32: 1>} : vector<128x128xi32>
    %2 = vector.extract_strided_slice %0 {offsets = [0, 0], sizes = [128, 1], strides = [1, 1]} : vector<128x4xi32> to vector<128x1xi32>
    %3 = vector.broadcast %2 : vector<128x1xi32> to vector<128x128xi32>
    %4 = arith.cmpi eq, %1, %3 : vector<128x128xi32>
    %5 = arith.extui %4 : vector<128x128xi1> to vector<128x128xi32>
    %6 = arith.sitofp %5 : vector<128x128xi32> to vector<128x128xf32>
    %7 = vector.extract_strided_slice %0 {offsets = [0, 1], sizes = [128, 1], strides = [1, 1]} : vector<128x4xi32> to vector<128x1xi32>
    %8 = vector.broadcast %7 : vector<128x1xi32> to vector<128x128xi32>
    %9 = arith.cmpi eq, %1, %8 : vector<128x128xi32>
    %10 = arith.extui %9 : vector<128x128xi1> to vector<128x128xi32>
    %11 = arith.sitofp %10 : vector<128x128xi32> to vector<128x128xf32>
    %12 = arith.addf %6, %11 : vector<128x128xf32>
    %13 = vector.extract_strided_slice %0 {offsets = [0, 2], sizes = [128, 1], strides = [1, 1]} : vector<128x4xi32> to vector<128x1xi32>
    %14 = vector.broadcast %13 : vector<128x1xi32> to vector<128x128xi32>
    %15 = arith.cmpi eq, %1, %14 : vector<128x128xi32>
    %16 = arith.extui %15 : vector<128x128xi1> to vector<128x128xi32>
    %17 = arith.sitofp %16 : vector<128x128xi32> to vector<128x128xf32>
    %18 = arith.addf %12, %17 : vector<128x128xf32>
    %19 = vector.extract_strided_slice %0 {offsets = [0, 3], sizes = [128, 1], strides = [1, 1]} : vector<128x4xi32> to vector<128x1xi32>
    %20 = vector.broadcast %19 : vector<128x1xi32> to vector<128x128xi32>
    %21 = arith.cmpi eq, %1, %20 : vector<128x128xi32>
    %22 = arith.extui %21 : vector<128x128xi1> to vector<128x128xi32>
    %23 = arith.sitofp %22 : vector<128x128xi32> to vector<128x128xf32>
    %24 = arith.addf %18, %23 : vector<128x128xf32>
    %c0_1 = arith.constant 0 : index
    %c0_2 = arith.constant 0 : index
    %25 = vector.load %arg2[%c0_1, %c0_2] : memref<128x128xf32, #tpu.memory_space<vmem>>, vector<128x128xf32>
    %cst = arith.constant dense<0.000000e+00> : vector<128x128xf32>
    %26 = tpu.matmul %24, %25, %cst {dimension_numbers = #tpu.dot_dimension_numbers<[1], [0], [0], [1], [0, 0, 1, 1], [], []>} : vector<128x128xf32>, vector<128x128xf32>, vector<128x128xf32> -> vector<128x128xf32>
    %c0_3 = arith.constant 0 : index
    %c0_4 = arith.constant 0 : index
    %27 = vector.load %arg5[%c0_3, %c0_4] : memref<128x128xf32, #tpu.memory_space<vmem>>, vector<128x128xf32>
    %cst_5 = arith.constant dense<0.000000e+00> : vector<128x128xf32>
    %28 = tpu.matmul %26, %27, %cst_5 {dimension_numbers = #tpu.dot_dimension_numbers<[1], [0], [0], [1], [0, 0, 1, 1], [], []>} : vector<128x128xf32>, vector<128x128xf32>, vector<128x128xf32> -> vector<128x128xf32>
    %c0_6 = arith.constant 0 : index
    %c0_7 = arith.constant 0 : index
    %29 = vector.load %arg6[%c0_6, %c0_7] : memref<1x128xf32, #tpu.memory_space<vmem>>, vector<1x128xf32>
    %30 = vector.broadcast %29 : vector<1x128xf32> to vector<128x128xf32>
    %31 = arith.addf %28, %30 : vector<128x128xf32>
    %cst_8 = arith.constant 0.000000e+00 : f32
    %32 = vector.broadcast %cst_8 : f32 to vector<128x128xf32>
    %33 = arith.maximumf %31, %32 : vector<128x128xf32>
    %c0_9 = arith.constant 0 : index
    %c0_10 = arith.constant 0 : index
    %34 = vector.load %arg7[%c0_9, %c0_10] : memref<128x128xf32, #tpu.memory_space<vmem>>, vector<128x128xf32>
    %cst_11 = arith.constant dense<0.000000e+00> : vector<128x128xf32>
    %35 = tpu.matmul %33, %34, %cst_11 {dimension_numbers = #tpu.dot_dimension_numbers<[1], [0], [0], [1], [0, 0, 1, 1], [], []>} : vector<128x128xf32>, vector<128x128xf32>, vector<128x128xf32> -> vector<128x128xf32>
    %c0_12 = arith.constant 0 : index
    %c0_13 = arith.constant 0 : index
    %36 = vector.load %arg8[%c0_12, %c0_13] : memref<1x128xf32, #tpu.memory_space<vmem>>, vector<1x128xf32>
    %37 = vector.broadcast %36 : vector<1x128xf32> to vector<128x128xf32>
    %38 = arith.addf %35, %37 : vector<128x128xf32>
    %cst_14 = arith.constant 0.000000e+00 : f32
    %39 = vector.broadcast %cst_14 : f32 to vector<128x128xf32>
    %40 = arith.maximumf %38, %39 : vector<128x128xf32>
    %c0_15 = arith.constant 0 : index
    %c0_16 = arith.constant 0 : index
    %41 = vector.load %arg3[%c0_15, %c0_16] : memref<3x128xf32, #tpu.memory_space<vmem>>, vector<1x128xf32>
    %c0_17 = arith.constant 0 : index
    %c0_18 = arith.constant 0 : index
    %42 = vector.load %arg4[%c0_17, %c0_18] : memref<3x128xf32, #tpu.memory_space<vmem>>, vector<1x128xf32>
    %43 = vector.broadcast %41 : vector<1x128xf32> to vector<128x128xf32>
    %44 = arith.mulf %26, %43 : vector<128x128xf32>
    %cst_19 = arith.constant dense<0.000000e+00> : vector<128xf32>
    %45 = vector.multi_reduction <add>, %44, %cst_19 [1] : vector<128x128xf32> to vector<128xf32>
    %46 = vector.shape_cast %45 : vector<128xf32> to vector<128x1xf32>
    %47 = vector.broadcast %46 : vector<128x1xf32> to vector<128x128xf32>
    %48 = arith.mulf %26, %47 : vector<128x128xf32>
    %49 = vector.broadcast %42 : vector<1x128xf32> to vector<128x128xf32>
    %50 = arith.addf %48, %49 : vector<128x128xf32>
    %51 = arith.addf %50, %26 : vector<128x128xf32>
    %c1 = arith.constant 1 : index
    %c0_20 = arith.constant 0 : index
    %52 = vector.load %arg3[%c1, %c0_20] : memref<3x128xf32, #tpu.memory_space<vmem>>, vector<1x128xf32>
    %c1_21 = arith.constant 1 : index
    %c0_22 = arith.constant 0 : index
    %53 = vector.load %arg4[%c1_21, %c0_22] : memref<3x128xf32, #tpu.memory_space<vmem>>, vector<1x128xf32>
    %54 = vector.broadcast %52 : vector<1x128xf32> to vector<128x128xf32>
    %55 = arith.mulf %51, %54 : vector<128x128xf32>
    %cst_23 = arith.constant dense<0.000000e+00> : vector<128xf32>
    %56 = vector.multi_reduction <add>, %55, %cst_23 [1] : vector<128x128xf32> to vector<128xf32>
    %57 = vector.shape_cast %56 : vector<128xf32> to vector<128x1xf32>
    %58 = vector.broadcast %57 : vector<128x1xf32> to vector<128x128xf32>
    %59 = arith.mulf %26, %58 : vector<128x128xf32>
    %60 = vector.broadcast %53 : vector<1x128xf32> to vector<128x128xf32>
    %61 = arith.addf %59, %60 : vector<128x128xf32>
    %62 = arith.addf %61, %51 : vector<128x128xf32>
    %c2 = arith.constant 2 : index
    %c0_24 = arith.constant 0 : index
    %63 = vector.load %arg3[%c2, %c0_24] : memref<3x128xf32, #tpu.memory_space<vmem>>, vector<1x128xf32>
    %c2_25 = arith.constant 2 : index
    %c0_26 = arith.constant 0 : index
    %64 = vector.load %arg4[%c2_25, %c0_26] : memref<3x128xf32, #tpu.memory_space<vmem>>, vector<1x128xf32>
    %65 = vector.broadcast %63 : vector<1x128xf32> to vector<128x128xf32>
    %66 = arith.mulf %62, %65 : vector<128x128xf32>
    %cst_27 = arith.constant dense<0.000000e+00> : vector<128xf32>
    %67 = vector.multi_reduction <add>, %66, %cst_27 [1] : vector<128x128xf32> to vector<128xf32>
    %68 = vector.shape_cast %67 : vector<128xf32> to vector<128x1xf32>
    %69 = vector.broadcast %68 : vector<128x1xf32> to vector<128x128xf32>
    %70 = arith.mulf %26, %69 : vector<128x128xf32>
    %71 = vector.broadcast %64 : vector<1x128xf32> to vector<128x128xf32>
    %72 = arith.addf %70, %71 : vector<128x128xf32>
    %73 = arith.addf %72, %62 : vector<128x128xf32>
    %c0_28 = arith.constant 0 : index
    %c0_29 = arith.constant 0 : index
    %74 = vector.load %arg9[%c0_28, %c0_29] : memref<1x128xf32, #tpu.memory_space<vmem>>, vector<1x128xf32>
    %cst_30 = arith.constant dense<0.000000e+00> : vector<1x128xf32>
    %75 = tpu.matmul %74, %73, %cst_30 {dimension_numbers = #tpu.dot_dimension_numbers<[1], [1], [0], [0], [0, 0, 1, 0], [], []>} : vector<1x128xf32>, vector<128x128xf32>, vector<1x128xf32> -> vector<1x128xf32>
    %c0_31 = arith.constant 0 : index
    %c0_32 = arith.constant 0 : index
    %76 = vector.load %arg10[%c0_31, %c0_32] : memref<1x128xf32, #tpu.memory_space<vmem>>, vector<1x128xf32>
    %cst_33 = arith.constant dense<0.000000e+00> : vector<1x128xf32>
    %77 = tpu.matmul %76, %40, %cst_33 {dimension_numbers = #tpu.dot_dimension_numbers<[1], [1], [0], [0], [0, 0, 1, 0], [], []>} : vector<1x128xf32>, vector<128x128xf32>, vector<1x128xf32> -> vector<1x128xf32>
    %78 = arith.addf %75, %77 : vector<1x128xf32>
    %c0_34 = arith.constant 0 : index
    %c0_35 = arith.constant 0 : index
    %79 = vector.load %arg11[%c0_34, %c0_35] : memref<1x1xf32, #tpu.memory_space<vmem>>, vector<1x1xf32>
    %80 = vector.broadcast %79 : vector<1x1xf32> to vector<1x128xf32>
    %81 = arith.addf %78, %80 : vector<1x128xf32>
    %82 = arith.negf %81 : vector<1x128xf32>
    %83 = math.exp %82 : vector<1x128xf32>
    %cst_36 = arith.constant 1.000000e+00 : f32
    %84 = vector.broadcast %cst_36 : f32 to vector<1x128xf32>
    %85 = arith.addf %84, %83 : vector<1x128xf32>
    %86 = arith.divf %84, %85 : vector<1x128xf32>
    %c0_37 = arith.constant 0 : index
    %c0_38 = arith.constant 0 : index
    %87 = vector.load %arg12[%c0_37, %c0_38] : memref<1x128xf32, #tpu.memory_space<vmem>>, vector<1x128xf32>
    tpu.vector_store %arg12[%c0_37, %c0_38], %86 {strides = array<i32>} : memref<1x128xf32, #tpu.memory_space<vmem>>, vector<1x128xf32>,
    return
  }
  func.func @transform_0(%arg0: i32) -> (i32, i32) {
    %c0_i32 = arith.constant 0 : i32
    %c0_i32_0 = arith.constant 0 : i32
    return %arg0, %c0_i32 : i32, i32
  }
  func.func @transform_1(%arg0: i32) -> (i32, i32) {
    %c0_i32 = arith.constant 0 : i32
    %c0_i32_0 = arith.constant 0 : i32
    %c0_i32_1 = arith.constant 0 : i32
    return %c0_i32, %c0_i32_0 : i32, i32
  }
  func.func @transform_2(%arg0: i32) -> (i32, i32) {
    %c0_i32 = arith.constant 0 : i32
    %c0_i32_0 = arith.constant 0 : i32
    %c0_i32_1 = arith.constant 0 : i32
    return %c0_i32, %c0_i32_0 : i32, i32
  }
  func.func @transform_3(%arg0: i32) -> (i32, i32) {
    %c0_i32 = arith.constant 0 : i32
    %c0_i32_0 = arith.constant 0 : i32
    %c0_i32_1 = arith.constant 0 : i32
    return %c0_i32, %c0_i32_0 : i32, i32
  }
  func.func @transform_4(%arg0: i32) -> (i32, i32) {
    %c0_i32 = arith.constant 0 : i32
    %c0_i32_0 = arith.constant 0 : i32
    %c0_i32_1 = arith.constant 0 : i32
    return %c0_i32, %c0_i32_0 : i32, i32
  }
  func.func @transform_5(%arg0: i32) -> (i32, i32) {
    %c0_i32 = arith.constant 0 : i32
    %c0_i32_0 = arith.constant 0 : i32
    %c0_i32_1 = arith.constant 0 : i32
    return %c0_i32, %c0_i32_0 : i32, i32
  }
  func.func @transform_6(%arg0: i32) -> (i32, i32) {
    %c0_i32 = arith.constant 0 : i32
    %c0_i32_0 = arith.constant 0 : i32
    %c0_i32_1 = arith.constant 0 : i32
    return %c0_i32, %c0_i32_0 : i32, i32
  }
  func.func @transform_7(%arg0: i32) -> (i32, i32) {
    %c0_i32 = arith.constant 0 : i32
    %c0_i32_0 = arith.constant 0 : i32
    %c0_i32_1 = arith.constant 0 : i32
    return %c0_i32, %c0_i32_0 : i32, i32
  }
  func.func @transform_8(%arg0: i32) -> (i32, i32) {
    %c0_i32 = arith.constant 0 : i32
    %c0_i32_0 = arith.constant 0 : i32
    %c0_i32_1 = arith.constant 0 : i32
    return %c0_i32, %c0_i32_0 : i32, i32
  }
  func.func @transform_9(%arg0: i32) -> (i32, i32) {
    %c0_i32 = arith.constant 0 : i32
    %c0_i32_0 = arith.constant 0 : i32
    %c0_i32_1 = arith.constant 0 : i32
    return %c0_i32, %c0_i32_0 : i32, i32
  }
  func.func @transform_10(%arg0: i32) -> (i32, i32) {
    %c0_i32 = arith.constant 0 : i32
    %c0_i32_0 = arith.constant 0 : i32
    %c0_i32_1 = arith.constant 0 : i32
    return %c0_i32, %c0_i32_0 : i32, i32
  }
  func.func @transform_11(%arg0: i32) -> (i32, i32) {
    %c0_i32 = arith.constant 0 : i32
    %c0_i32_0 = arith.constant 0 : i32
    return %c0_i32, %arg0 : i32, i32
  }
}

</mosaic_0001>

<llo_original>
// kernel: dcn_forward.1
$region0: #{dcn_forward.1}
  #allocation0 [shape = 'u32[]', space=smem, size = 0x4, offset = 0x4, fixed_abs, tag = 'smem constant byte address 0x4 - core index']
  #allocation1 [shape = 'u32[144,128]{1,0:T(1,128)}', space=vmem, size = 0x12000, scoped, tag = 'internal scratch']
  #allocation2 [shape = 'f32[1,1]{1,0:T(1,128)S(1)}', space=vmem, size = 0x200, scoped, tag = 'scoped memory for dcn_forward.1']
  %s0 = inlined_call_operand.vmem [shape: s32[384,4], index: 0, kind: input, shape index: {}]
  %s1 = inlined_call_operand.vmem [shape: f32[128,128], index: 1, kind: input, shape index: {}]
  %s2 = inlined_call_operand.vmem [shape: f32[3,128], index: 2, kind: input, shape index: {}]
  %s3 = inlined_call_operand.vmem [shape: f32[3,128], index: 3, kind: input, shape index: {}]
  %s4 = inlined_call_operand.vmem [shape: f32[128,128], index: 4, kind: input, shape index: {}]
  %s5 = inlined_call_operand.vmem [shape: f32[1,128], index: 5, kind: input, shape index: {}]
  %s6 = inlined_call_operand.vmem [shape: f32[128,128], index: 6, kind: input, shape index: {}]
  %s7 = inlined_call_operand.vmem [shape: f32[1,128], index: 7, kind: input, shape index: {}]
  %s8 = inlined_call_operand.vmem [shape: f32[1,128], index: 8, kind: input, shape index: {}]
  %s9 = inlined_call_operand.vmem [shape: f32[1,128], index: 9, kind: input, shape index: {}]
  %s10 = inlined_call_operand.<no memory space> [shape: f32[1,1], index: 10, kind: input, shape index: {}]
  %s11 = inlined_call_operand.vmem [shape: f32[1,384], index: 11, kind: output, shape index: {}]
  %s12 = sld [smem:[#allocation0]]
  $region77: #{dcn_forward.1} parent=0
    _
  %s14 = ssub.s32 1, %s12
  %s15 = scalar_select 0, %s14, %s12
  %v16 = vstv %s10
  %17 = vst [vmem:[#allocation2] sm:$0x1] %v16
  loop: start=0, step=1, limit=5
  $region2: #{dcn_forward.1} parent=0 // loop_pre_header
    _
  $region3: #{dcn_forward.1} parent=0 // loop_header
    %s19 = sphi 0, %s23
    %p20 = scmp.ge.s32.totalorder %s19, 5
    %s29 = sphi 0, %s31
    %s32 = sphi 0, %s29
    %s33 = sphi 0, %s32
    %s49 = sphi 0, %s33
    %s53 = sphi 0, %s53
    %s55 = sphi 0, %s53
    %s56 = sphi 0, %s55
    %s70 = sphi 0, %s56
    %s74 = sphi 0, %s74
    %s76 = sphi 0, %s74
    %s77 = sphi 0, %s76
    %s91 = sphi 0, %s77
    %s95 = sphi 0, %s95
    %s97 = sphi 0, %s95
    %s98 = sphi 0, %s97
    %s112 = sphi 0, %s98
    %s116 = sphi 0, %s116
    %s118 = sphi 0, %s116
    %s119 = sphi 0, %s118
    %s133 = sphi 0, %s119
    %s137 = sphi 0, %s137
    %s139 = sphi 0, %s137
    %s140 = sphi 0, %s139
    %s154 = sphi 0, %s140
    %s158 = sphi 0, %s158
    %s160 = sphi 0, %s158
    %s161 = sphi 0, %s160
    %s175 = sphi 0, %s161
    %s179 = sphi 0, %s179
    %s181 = sphi 0, %s179
    %s182 = sphi 0, %s181
    %s196 = sphi 0, %s182
    %s200 = sphi 0, %s200
    %s202 = sphi 0, %s200
    %s203 = sphi 0, %s202
    %s217 = sphi 0, %s203
    %s221 = sphi 0, %s221
    %s223 = sphi 0, %s221
    %s224 = sphi 0, %s223
    %s238 = sphi 0, %s224
    %s242 = sphi 0, %s242
    %s244 = sphi 0, %s242
    %s245 = sphi 0, %s244
    %s259 = sphi 0, %s245
    %s265 = sphi 0, %s267
    %s268 = sphi 0, %s265
    %s269 = sphi 0, %s268
    %s285 = sphi 0, %s269
  $region4: #{dcn_forward.1} parent=0 // loop_header_branch
    %22 = sbr.rel (%p20) target = $region8
  $region5: #{dcn_forward.1} parent=0 // loop_body
    %s24 = ssub.s32 %s19, 1
    %s25 = ssub.s32 %s19, 2
    %s26 = sadd.s32 %s19, 1
    %s27 = ssub.s32 %s19, %s26
    %p28 = scmp.eq.s32.totalorder %s27, 0
    %s30 = sadd.s32 %s29, 1
    %s31 = scalar_select %p28, %s29, %s30
    %p34 = pneg %p28
    %p35 = scmp.eq.s32.totalorder %s19, 2
    %p36 = por %p34, %p35
    %p37 = scmp.ne.s32.totalorder %s29, %s32
    %p38 = scmp.eq.s32.totalorder %s19, 0
    %p39 = por %p37, %p38
    %p40 = scmp.ne.s32.totalorder %s29, %s32
    %p41 = scmp.eq.s32.totalorder %s24, 2
    %p42 = por %p40, %p41
    %p43 = scmp.ne.s32.totalorder %s32, %s33
    %p44 = scmp.eq.s32.totalorder %s24, 0
    %p45 = por %p43, %p44
    %p46 = scmp.ne.s32.totalorder %s32, %s33
    %p47 = scmp.eq.s32.totalorder %s25, 2
    %p48 = por %p46, %p47
    %p50 = scmp.ne.s32.totalorder %s33, %s49
    %p51 = scmp.eq.s32.totalorder %s25, 0
    %p52 = por %p50, %p51
    %s54 = sadd.s32 %s53, 1
    %p57 = scmp.eq.s32.totalorder %s19, 2
    %p58 = scmp.ne.s32.totalorder %s53, %s55
    %p59 = scmp.eq.s32.totalorder %s19, 0
    %p60 = por %p58, %p59
    %p61 = scmp.ne.s32.totalorder %s53, %s55
    %p62 = scmp.eq.s32.totalorder %s24, 2
    %p63 = por %p61, %p62
    %p64 = scmp.ne.s32.totalorder %s55, %s56
    %p65 = scmp.eq.s32.totalorder %s24, 0
    %p66 = por %p64, %p65
    %p67 = scmp.ne.s32.totalorder %s55, %s56
    %p68 = scmp.eq.s32.totalorder %s25, 2
    %p69 = por %p67, %p68
    %p71 = scmp.ne.s32.totalorder %s56, %s70
    %p72 = scmp.eq.s32.totalorder %s25, 0
    %p73 = por %p71, %p72
    %s75 = sadd.s32 %s74, 1
    %p78 = scmp.eq.s32.totalorder %s19, 2
    %p79 = scmp.ne.s32.totalorder %s74, %s76
    %p80 = scmp.eq.s32.totalorder %s19, 0
    %p81 = por %p79, %p80
    %p82 = scmp.ne.s32.totalorder %s74, %s76
    %p83 = scmp.eq.s32.totalorder %s24, 2
    %p84 = por %p82, %p83
    %p85 = scmp.ne.s32.totalorder %s76, %s77
    %p86 = scmp.eq.s32.totalorder %s24, 0
    %p87 = por %p85, %p86
    %p88 = scmp.ne.s32.totalorder %s76, %s77
    %p89 = scmp.eq.s32.totalorder %s25, 2
    %p90 = por %p88, %p89
    %p92 = scmp.ne.s32.totalorder %s77, %s91
    %p93 = scmp.eq.s32.totalorder %s25, 0
    %p94 = por %p92, %p93
    %s96 = sadd.s32 %s95, 1
    %p99 = scmp.eq.s32.totalorder %s19, 2
    %p100 = scmp.ne.s32.totalorder %s95, %s97
    %p101 = scmp.eq.s32.totalorder %s19, 0
    %p102 = por %p100, %p101
    %p103 = scmp.ne.s32.totalorder %s95, %s97
    %p104 = scmp.eq.s32.totalorder %s24, 2
    %p105 = por %p103, %p104
    %p106 = scmp.ne.s32.totalorder %s97, %s98
    %p107 = scmp.eq.s32.totalorder %s24, 0
    %p108 = por %p106, %p107
    %p109 = scmp.ne.s32.totalorder %s97, %s98
    %p110 = scmp.eq.s32.totalorder %s25, 2
    %p111 = por %p109, %p110
    %p113 = scmp.ne.s32.totalorder %s98, %s112
    %p114 = scmp.eq.s32.totalorder %s25, 0
    %p115 = por %p113, %p114
    %s117 = sadd.s32 %s116, 1
    %p120 = scmp.eq.s32.totalorder %s19, 2
    %p121 = scmp.ne.s32.totalorder %s116, %s118
    %p122 = scmp.eq.s32.totalorder %s19, 0
    %p123 = por %p121, %p122
    %p124 = scmp.ne.s32.totalorder %s116, %s118
    %p125 = scmp.eq.s32.totalorder %s24, 2
    %p126 = por %p124, %p125
    %p127 = scmp.ne.s32.totalorder %s118, %s119
    %p128 = scmp.eq.s32.totalorder %s24, 0
    %p129 = por %p127, %p128
    %p130 = scmp.ne.s32.totalorder %s118, %s119
    %p131 = scmp.eq.s32.totalorder %s25, 2
    %p132 = por %p130, %p131
    %p134 = scmp.ne.s32.totalorder %s119, %s133
    %p135 = scmp.eq.s32.totalorder %s25, 0
    %p136 = por %p134, %p135
    %s138 = sadd.s32 %s137, 1
    %p141 = scmp.eq.s32.totalorder %s19, 2
    %p142 = scmp.ne.s32.totalorder %s137, %s139
    %p143 = scmp.eq.s32.totalorder %s19, 0
    %p144 = por %p142, %p143
    %p145 = scmp.ne.s32.totalorder %s137, %s139
    %p146 = scmp.eq.s32.totalorder %s24, 2
    %p147 = por %p145, %p146
    %p148 = scmp.ne.s32.totalorder %s139, %s140
    %p149 = scmp.eq.s32.totalorder %s24, 0
    %p150 = por %p148, %p149
    %p151 = scmp.ne.s32.totalorder %s139, %s140
    %p152 = scmp.eq.s32.totalorder %s25, 2
    %p153 = por %p151, %p152
    %p155 = scmp.ne.s32.totalorder %s140, %s154
    %p156 = scmp.eq.s32.totalorder %s25, 0
    %p157 = por %p155, %p156
    %s159 = sadd.s32 %s158, 1
    %p162 = scmp.eq.s32.totalorder %s19, 2
    %p163 = scmp.ne.s32.totalorder %s158, %s160
    %p164 = scmp.eq.s32.totalorder %s19, 0
    %p165 = por %p163, %p164
    %p166 = scmp.ne.s32.totalorder %s158, %s160
    %p167 = scmp.eq.s32.totalorder %s24, 2
    %p168 = por %p166, %p167
    %p169 = scmp.ne.s32.totalorder %s160, %s161
    %p170 = scmp.eq.s32.totalorder %s24, 0
    %p171 = por %p169, %p170
    %p172 = scmp.ne.s32.totalorder %s160, %s161
    %p173 = scmp.eq.s32.totalorder %s25, 2
    %p174 = por %p172, %p173
    %p176 = scmp.ne.s32.totalorder %s161, %s175
    %p177 = scmp.eq.s32.totalorder %s25, 0
    %p178 = por %p176, %p177
    %s180 = sadd.s32 %s179, 1
    %p183 = scmp.eq.s32.totalorder %s19, 2
    %p184 = scmp.ne.s32.totalorder %s179, %s181
    %p185 = scmp.eq.s32.totalorder %s19, 0
    %p186 = por %p184, %p185
    %p187 = scmp.ne.s32.totalorder %s179, %s181
    %p188 = scmp.eq.s32.totalorder %s24, 2
    %p189 = por %p187, %p188
    %p190 = scmp.ne.s32.totalorder %s181, %s182
    %p191 = scmp.eq.s32.totalorder %s24, 0
    %p192 = por %p190, %p191
    %p193 = scmp.ne.s32.totalorder %s181, %s182
    %p194 = scmp.eq.s32.totalorder %s25, 2
    %p195 = por %p193, %p194
    %p197 = scmp.ne.s32.totalorder %s182, %s196
    %p198 = scmp.eq.s32.totalorder %s25, 0
    %p199 = por %p197, %p198
    %s201 = sadd.s32 %s200, 1
    %p204 = scmp.eq.s32.totalorder %s19, 2
    %p205 = scmp.ne.s32.totalorder %s200, %s202
    %p206 = scmp.eq.s32.totalorder %s19, 0
    %p207 = por %p205, %p206
    %p208 = scmp.ne.s32.totalorder %s200, %s202
    %p209 = scmp.eq.s32.totalorder %s24, 2
    %p210 = por %p208, %p209
    %p211 = scmp.ne.s32.totalorder %s202, %s203
    %p212 = scmp.eq.s32.totalorder %s24, 0
    %p213 = por %p211, %p212
    %p214 = scmp.ne.s32.totalorder %s202, %s203
    %p215 = scmp.eq.s32.totalorder %s25, 2
    %p216 = por %p214, %p215
    %p218 = scmp.ne.s32.totalorder %s203, %s217
    %p219 = scmp.eq.s32.totalorder %s25, 0
    %p220 = por %p218, %p219
    %s222 = sadd.s32 %s221, 1
    %p225 = scmp.eq.s32.totalorder %s19, 2
    %p226 = scmp.ne.s32.totalorder %s221, %s223
    %p227 = scmp.eq.s32.totalorder %s19, 0
    %p228 = por %p226, %p227
    %p229 = scmp.ne.s32.totalorder %s221, %s223
    %p230 = scmp.eq.s32.totalorder %s24, 2
    %p231 = por %p229, %p230
    %p232 = scmp.ne.s32.totalorder %s223, %s224
    %p233 = scmp.eq.s32.totalorder %s24, 0
    %p234 = por %p232, %p233
    %p235 = scmp.ne.s32.totalorder %s223, %s224
    %p236 = scmp.eq.s32.totalorder %s25, 2
    %p237 = por %p235, %p236
    %p239 = scmp.ne.s32.totalorder %s224, %s238
    %p240 = scmp.eq.s32.totalorder %s25, 0
    %p241 = por %p239, %p240
    %s243 = sadd.s32 %s242, 1
    %p246 = scmp.eq.s32.totalorder %s19, 2
    %p247 = scmp.ne.s32.totalorder %s242, %s244
    %p248 = scmp.eq.s32.totalorder %s19, 0
    %p249 = por %p247, %p248
    %p250 = scmp.ne.s32.totalorder %s242, %s244
    %p251 = scmp.eq.s32.totalorder %s24, 2
    %p252 = por %p250, %p251
    %p253 = scmp.ne.s32.totalorder %s244, %s245
    %p254 = scmp.eq.s32.totalorder %s24, 0
    %p255 = por %p253, %p254
    %p256 = scmp.ne.s32.totalorder %s244, %s245
    %p257 = scmp.eq.s32.totalorder %s25, 2
    %p258 = por %p256, %p257
    %p260 = scmp.ne.s32.totalorder %s245, %s259
    %p261 = scmp.eq.s32.totalorder %s25, 0
    %p262 = por %p260, %p261
    %s263 = ssub.s32 %s19, %s26
    %p264 = scmp.eq.s32.totalorder %s263, 0
    %s266 = sadd.s32 %s265, 1
    %s267 = scalar_select %p264, %s265, %s266
    %p270 = pneg %p264
    %p271 = scmp.eq.s32.totalorder %s19, 2
    %p272 = por %p270, %p271
    %p273 = scmp.ne.s32.totalorder %s265, %s268
    %p274 = scmp.eq.s32.totalorder %s19, 0
    %p275 = por %p273, %p274
    %p276 = scmp.ne.s32.totalorder %s265, %s268
    %p277 = scmp.eq.s32.totalorder %s24, 2
    %p278 = por %p276, %p277
    %p279 = scmp.ne.s32.totalorder %s268, %s269
    %p280 = scmp.eq.s32.totalorder %s24, 0
    %p281 = por %p279, %p280
    %p282 = scmp.ne.s32.totalorder %s268, %s269
    %p283 = scmp.eq.s32.totalorder %s25, 2
    %p284 = por %p282, %p283
    %p286 = scmp.ne.s32.totalorder %s269, %s285
    %p287 = scmp.eq.s32.totalorder %s25, 0
    %p288 = por %p286, %p287
    %p289 = scmp.le.s32.totalorder 1, %s19
    %p290 = scmp.lt.s32.totalorder %s19, 4
    %p291 = pnand %p289, %p290
    %p292 = pneg %p291
    // Predicated region
    $region9: #{dcn_forward.1} parent=5 // pred_check
      _
    $region10: #{dcn_forward.1} parent=5 // pred_check_branch
      %294 = sbr.rel (%p291) target = $region12
    $region11: #{dcn_forward.1} parent=5 // pred_region
      %s295 = ssub.s32 %s19, 1
      // Predicated region
      $region13: #{dcn_forward.1} parent=11 // pred_check
        %p296 = pneg %p66
      $region14: #{dcn_forward.1} parent=11 // pred_check_branch
        %298 = sbr.rel (%p296) target = $region16
      $region15: #{dcn_forward.1} parent=11 // pred_region
        _
      $region16: #{dcn_forward.1} parent=11 // pred_fallthru
        _
      // Predicated region
      $region17: #{dcn_forward.1} parent=11 // pred_check
        %p299 = pneg %p87
      $region18: #{dcn_forward.1} parent=11 // pred_check_branch
        %301 = sbr.rel (%p299) target = $region20
      $region19: #{dcn_forward.1} parent=11 // pred_region
        _
      $region20: #{dcn_forward.1} parent=11 // pred_fallthru
        _
      // Predicated region
      $region21: #{dcn_forward.1} parent=11 // pred_check
        %p302 = pneg %p108
      $region22: #{dcn_forward.1} parent=11 // pred_check_branch
        %304 = sbr.rel (%p302) target = $region24
      $region23: #{dcn_forward.1} parent=11 // pred_region
        _
      $region24: #{dcn_forward.1} parent=11 // pred_fallthru
        _
      // Predicated region
      $region25: #{dcn_forward.1} parent=11 // pred_check
        %p305 = pneg %p129
      $region26: #{dcn_forward.1} parent=11 // pred_check_branch
        %307 = sbr.rel (%p305) target = $region28
      $region27: #{dcn_forward.1} parent=11 // pred_region
        _
      $region28: #{dcn_forward.1} parent=11 // pred_fallthru
        _
      // Predicated region
      $region29: #{dcn_forward.1} parent=11 // pred_check
        %p308 = pneg %p150
      $region30: #{dcn_forward.1} parent=11 // pred_check_branch
        %310 = sbr.rel (%p308) target = $region32
      $region31: #{dcn_forward.1} parent=11 // pred_region
        _
      $region32: #{dcn_forward.1} parent=11 // pred_fallthru
        _
      // Predicated region
      $region33: #{dcn_forward.1} parent=11 // pred_check
        %p311 = pneg %p171
      $region34: #{dcn_forward.1} parent=11 // pred_check_branch
        %313 = sbr.rel (%p311) target = $region36
      $region35: #{dcn_forward.1} parent=11 // pred_region
        _
      $region36: #{dcn_forward.1} parent=11 // pred_fallthru
        _
      // Predicated region
      $region37: #{dcn_forward.1} parent=11 // pred_check
        %p314 = pneg %p192
      $region38: #{dcn_forward.1} parent=11 // pred_check_branch
        %316 = sbr.rel (%p314) target = $region40
      $region39: #{dcn_forward.1} parent=11 // pred_region
        _
      $region40: #{dcn_forward.1} parent=11 // pred_fallthru
        _
      // Predicated region
      $region41: #{dcn_forward.1} parent=11 // pred_check
        %p317 = pneg %p213
      $region42: #{dcn_forward.1} parent=11 // pred_check_branch
        %319 = sbr.rel (%p317) target = $region44
      $region43: #{dcn_forward.1} parent=11 // pred_region
        _
      $region44: #{dcn_forward.1} parent=11 // pred_fallthru
        _
      // Predicated region
      $region45: #{dcn_forward.1} parent=11 // pred_check
        %p320 = pneg %p234
      $region46: #{dcn_forward.1} parent=11 // pred_check_branch
        %322 = sbr.rel (%p320) target = $region48
      $region47: #{dcn_forward.1} parent=11 // pred_region
        _
      $region48: #{dcn_forward.1} parent=11 // pred_fallthru
        _
      // Predicated region
      $region49: #{dcn_forward.1} parent=11 // pred_check
        %p323 = pneg %p255
      $region50: #{dcn_forward.1} parent=11 // pred_check_branch
        %325 = sbr.rel (%p323) target = $region52
      $region51: #{dcn_forward.1} parent=11 // pred_region
        _
      $region52: #{dcn_forward.1} parent=11 // pred_fallthru
        _
    $region12: #{dcn_forward.1} parent=5 // pred_fallthru
      _
    %p326 = scmp.lt.s32.totalorder %s19, 3
    // Predicated region
    $region53: #{dcn_forward.1} parent=5 // pred_check
      %p327 = pneg %p326
    $region54: #{dcn_forward.1} parent=5 // pred_check_branch
      %329 = sbr.rel (%p327) target = $region56
    $region55: #{dcn_forward.1} parent=5 // pred_region
      // Predicated region
      $region57: #{dcn_forward.1} parent=55 // pred_check
        %p330 = pneg %p39
      $region58: #{dcn_forward.1} parent=55 // pred_check_branch
        %332 = sbr.rel (%p330) target = $region60
      $region59: #{dcn_forward.1} parent=55 // pred_region
        %s333 = smul.u32 16, %s19
        %p334 = scmp.lt.s32.totalorder %s333, 47
        %s335 = scalar_select %p334, %s333, 47
        %s336 = smul.addr %s335, 8
        %s337 = scalar_lea.vmem %s0, %s336
        %s338 = smul.u32 16, %s19
      $region60: #{dcn_forward.1} parent=55 // pred_fallthru
        _
    $region56: #{dcn_forward.1} parent=5 // pred_fallthru
      _
    %p339 = scmp.le.s32.totalorder 1, %s19
    %p340 = scmp.lt.s32.totalorder %s19, 4
    %p341 = pnand %p339, %p340
    %p342 = pneg %p341
    // Predicated region
    $region61: #{dcn_forward.1} parent=5 // pred_check
      _
    $region62: #{dcn_forward.1} parent=5 // pred_check_branch
      %344 = sbr.rel (%p341) target = $region64
    $region63: #{dcn_forward.1} parent=5 // pred_region
      %s345 = ssub.s32 %s19, 1
      %s346 = smul.u32 16, %s24
      %p347 = scmp.lt.s32.totalorder %s346, 47
      %s348 = scalar_select %p347, %s346, 47
      %s349 = smul.addr %s348, 8
      %s350 = scalar_lea.vmem %s0, %s349
      %p351 = pneg %p45
      %p352 = pneg %p42
      %p353 = pneg %p66
      %p354 = pneg %p63
      %p355 = pneg %p87
      %p356 = pneg %p84
      %p357 = pneg %p108
      %p358 = pneg %p105
      %p359 = pneg %p129
      %p360 = pneg %p126
      %p361 = pneg %p150
      %p362 = pneg %p147
      %p363 = pneg %p171
      %p364 = pneg %p168
      %p365 = pneg %p192
      %p366 = pneg %p189
      %p367 = pneg %p213
      %p368 = pneg %p210
      %p369 = pneg %p234
      %p370 = pneg %p231
      %p371 = pneg %p255
      %p372 = pneg %p252
      %p373 = pneg %p281
      %p374 = pneg %p278
      %p375 = scmp.lt.s32.totalorder %s24, 2
      %s376 = scalar_select %p375, %s24, 2
      %s377 = scalar_lea.vmem %s11, %s376
      %s378 = smul.u32 16, %s24
      %p379 = scmp.lt.s32.totalorder %s378, 47
      %s380 = scalar_select %p379, %s378, 47
      %s381 = smul.addr %s380, 8
      %s382 = scalar_lea.vmem %s0, %s381
      %s383 = smul.u32 16, %s24
      %p384 = scmp.lt.s32.totalorder %s24, 2
      %s385 = scalar_select %p384, %s24, 2
      %s386 = scalar_lea.vmem %s11, %s385
      %v387 = vld [vmem:[%s382] sm:$0xff]
      %v388 = vld [vmem:[%s382 + $0x8] sm:$0xff]
      %v389 = vld [vmem:[%s382 + $0x10] sm:$0xff]
      %v390 = vld [vmem:[%s382 + $0x18] sm:$0xff]
      %v391 = vld [vmem:[%s382 + $0x20] sm:$0xff]
      %v392 = vld [vmem:[%s382 + $0x28] sm:$0xff]
      %v393 = vld [vmem:[%s382 + $0x30] sm:$0xff]
      %v394 = vld [vmem:[%s382 + $0x38] sm:$0xff]
      %v395 = vld [vmem:[%s382 + $0x40] sm:$0xff]
      %v396 = vld [vmem:[%s382 + $0x48] sm:$0xff]
      %v397 = vld [vmem:[%s382 + $0x50] sm:$0xff]
      %v398 = vld [vmem:[%s382 + $0x58] sm:$0xff]
      %v399 = vld [vmem:[%s382 + $0x60] sm:$0xff]
      %v400 = vld [vmem:[%s382 + $0x68] sm:$0xff]
      %v401 = vld [vmem:[%s382 + $0x70] sm:$0xff]
      %v402 = vld [vmem:[%s382 + $0x78] sm:$0xff]
      %v403 = vlaneseq
      %v404 = vand.u32 %v403, 127
      %405 = vset.pattern.permute.xlu0 0
      %406 = vperm.xlu0 %405, %v387
      %v407 = vpop.permute.xlu0 %406
      %408 = vset.pattern.permute.xlu0 0
      %409 = vperm.xlu0 %408, %v388
      %v410 = vpop.permute.xlu0 %409
      %411 = vset.pattern.permute.xlu0 0
      %412 = vperm.xlu0 %411, %v389
      %v413 = vpop.permute.xlu0 %412
      %414 = vset.pattern.permute.xlu0 0
      %415 = vperm.xlu0 %414, %v390
      %v416 = vpop.permute.xlu0 %415
      %417 = vset.pattern.permute.xlu0 0
      %418 = vperm.xlu0 %417, %v391
      %v419 = vpop.permute.xlu0 %418
      %420 = vset.pattern.permute.xlu0 0
      %421 = vperm.xlu0 %420, %v392
      %v422 = vpop.permute.xlu0 %421
      %423 = vset.pattern.permute.xlu0 0
      %424 = vperm.xlu0 %423, %v393
      %v425 = vpop.permute.xlu0 %424
      %426 = vset.pattern.permute.xlu0 0
      %427 = vperm.xlu0 %426, %v394
      %v428 = vpop.permute.xlu0 %427
      %429 = vset.pattern.permute.xlu0 0
      %430 = vperm.xlu0 %429, %v395
      %v431 = vpop.permute.xlu0 %430
      %432 = vset.pattern.permute.xlu0 0
      %433 = vperm.xlu0 %432, %v396
      %v434 = vpop.permute.xlu0 %433
      %435 = vset.pattern.permute.xlu0 0
      %436 = vperm.xlu0 %435, %v397
      %v437 = vpop.permute.xlu0 %436
      %438 = vset.pattern.permute.xlu0 0
      %439 = vperm.xlu0 %438, %v398
      %v440 = vpop.permute.xlu0 %439
      %441 = vset.pattern.permute.xlu0 0
      %442 = vperm.xlu0 %441, %v399
      %v443 = vpop.permute.xlu0 %442
      %444 = vset.pattern.permute.xlu0 0
      %445 = vperm.xlu0 %444, %v400
      %v446 = vpop.permute.xlu0 %445
      %447 = vset.pattern.permute.xlu0 0
      %448 = vperm.xlu0 %447, %v401
      %v449 = vpop.permute.xlu0 %448
      %450 = vset.pattern.permute.xlu0 0
      %451 = vperm.xlu0 %450, %v402
      %v452 = vpop.permute.xlu0 %451
      %vm453 = vcmp.eq.s32.totalorder %v404, %v407
      %vm454 = vcmp.eq.s32.totalorder %v404, %v410
      %vm455 = vcmp.eq.s32.totalorder %v404, %v413
      %vm456 = vcmp.eq.s32.totalorder %v404, %v416
      %vm457 = vcmp.eq.s32.totalorder %v404, %v419
      %vm458 = vcmp.eq.s32.totalorder %v404, %v422
      %vm459 = vcmp.eq.s32.totalorder %v404, %v425
      %vm460 = vcmp.eq.s32.totalorder %v404, %v428
      %vm461 = vcmp.eq.s32.totalorder %v404, %v431
      %vm462 = vcmp.eq.s32.totalorder %v404, %v434
      %vm463 = vcmp.eq.s32.totalorder %v404, %v437
      %vm464 = vcmp.eq.s32.totalorder %v404, %v440
      %vm465 = vcmp.eq.s32.totalorder %v404, %v443
      %vm466 = vcmp.eq.s32.totalorder %v404, %v446
      %vm467 = vcmp.eq.s32.totalorder %v404, %v449
      %vm468 = vcmp.eq.s32.totalorder %v404, %v452
      %v469 = vsel %vm453, 1, 0
      %v470 = vsel %vm454, 1, 0
      %v471 = vsel %vm455, 1, 0
      %v472 = vsel %vm456, 1, 0
      %v473 = vsel %vm457, 1, 0
      %v474 = vsel %vm458, 1, 0
      %v475 = vsel %vm459, 1, 0
      %v476 = vsel %vm460, 1, 0
      %v477 = vsel %vm461, 1, 0
      %v478 = vsel %vm462, 1, 0
      %v479 = vsel %vm463, 1, 0
      %v480 = vsel %vm464, 1, 0
      %v481 = vsel %vm465, 1, 0
      %v482 = vsel %vm466, 1, 0
      %v483 = vsel %vm467, 1, 0
      %v484 = vsel %vm468, 1, 0
      %v485 = vcvt.s32.f32 %v469
      %v486 = vcvt.s32.f32 %v470
      %v487 = vcvt.s32.f32 %v471
      %v488 = vcvt.s32.f32 %v472
      %v489 = vcvt.s32.f32 %v473
      %v490 = vcvt.s32.f32 %v474
      %v491 = vcvt.s32.f32 %v475
      %v492 = vcvt.s32.f32 %v476
      %v493 = vcvt.s32.f32 %v477
      %v494 = vcvt.s32.f32 %v478
      %v495 = vcvt.s32.f32 %v479
      %v496 = vcvt.s32.f32 %v480
      %v497 = vcvt.s32.f32 %v481
      %v498 = vcvt.s32.f32 %v482
      %v499 = vcvt.s32.f32 %v483
      %v500 = vcvt.s32.f32 %v484
      %501 = vset.pattern.permute.xlu0 1
      %502 = vperm.xlu0 %501, %v387
      %v503 = vpop.permute.xlu0 %502
      %504 = vset.pattern.permute.xlu0 1
      %505 = vperm.xlu0 %504, %v388
      %v506 = vpop.permute.xlu0 %505
      %507 = vset.pattern.permute.xlu0 1
      %508 = vperm.xlu0 %507, %v389
      %v509 = vpop.permute.xlu0 %508
      %510 = vset.pattern.permute.xlu0 1
      %511 = vperm.xlu0 %510, %v390
      %v512 = vpop.permute.xlu0 %511
      %513 = vset.pattern.permute.xlu0 1
      %514 = vperm.xlu0 %513, %v391
      %v515 = vpop.permute.xlu0 %514
      %516 = vset.pattern.permute.xlu0 1
      %517 = vperm.xlu0 %516, %v392
      %v518 = vpop.permute.xlu0 %517
      %519 = vset.pattern.permute.xlu0 1
      %520 = vperm.xlu0 %519, %v393
      %v521 = vpop.permute.xlu0 %520
      %522 = vset.pattern.permute.xlu0 1
      %523 = vperm.xlu0 %522, %v394
      %v524 = vpop.permute.xlu0 %523
      %525 = vset.pattern.permute.xlu0 1
      %526 = vperm.xlu0 %525, %v395
      %v527 = vpop.permute.xlu0 %526
      %528 = vset.pattern.permute.xlu0 1
      %529 = vperm.xlu0 %528, %v396
      %v530 = vpop.permute.xlu0 %529
      %531 = vset.pattern.permute.xlu0 1
      %532 = vperm.xlu0 %531, %v397
      %v533 = vpop.permute.xlu0 %532
      %534 = vset.pattern.permute.xlu0 1
      %535 = vperm.xlu0 %534, %v398
      %v536 = vpop.permute.xlu0 %535
      %537 = vset.pattern.permute.xlu0 1
      %538 = vperm.xlu0 %537, %v399
      %v539 = vpop.permute.xlu0 %538
      %540 = vset.pattern.permute.xlu0 1
      %541 = vperm.xlu0 %540, %v400
      %v542 = vpop.permute.xlu0 %541
      %543 = vset.pattern.permute.xlu0 1
      %544 = vperm.xlu0 %543, %v401
      %v545 = vpop.permute.xlu0 %544
      %546 = vset.pattern.permute.xlu0 1
      %547 = vperm.xlu0 %546, %v402
      %v548 = vpop.permute.xlu0 %547
      %vm549 = vcmp.eq.s32.totalorder %v404, %v503
      %vm550 = vcmp.eq.s32.totalorder %v404, %v506
      %vm551 = vcmp.eq.s32.totalorder %v404, %v509
      %vm552 = vcmp.eq.s32.totalorder %v404, %v512
      %vm553 = vcmp.eq.s32.totalorder %v404, %v515
      %vm554 = vcmp.eq.s32.totalorder %v404, %v518
      %vm555 = vcmp.eq.s32.totalorder %v404, %v521
      %vm556 = vcmp.eq.s32.totalorder %v404, %v524
      %vm557 = vcmp.eq.s32.totalorder %v404, %v527
      %vm558 = vcmp.eq.s32.totalorder %v404, %v530
      %vm559 = vcmp.eq.s32.totalorder %v404, %v533
      %vm560 = vcmp.eq.s32.totalorder %v404, %v536
      %vm561 = vcmp.eq.s32.totalorder %v404, %v539
      %vm562 = vcmp.eq.s32.totalorder %v404, %v542
      %vm563 = vcmp.eq.s32.totalorder %v404, %v545
      %vm564 = vcmp.eq.s32.totalorder %v404, %v548
      %v565 = vsel %vm549, 1, 0
      %v566 = vsel %vm550, 1, 0
      %v567 = vsel %vm551, 1, 0
      %v568 = vsel %vm552, 1, 0
      %v569 = vsel %vm553, 1, 0
      %v570 = vsel %vm554, 1, 0
      %v571 = vsel %vm555, 1, 0
      %v572 = vsel %vm556, 1, 0
      %v573 = vsel %vm557, 1, 0
      %v574 = vsel %vm558, 1, 0
      %v575 = vsel %vm559, 1, 0
      %v576 = vsel %vm560, 1, 0
      %v577 = vsel %vm561, 1, 0
      %v578 = vsel %vm562, 1, 0
      %v579 = vsel %vm563, 1, 0
      %v580 = vsel %vm564, 1, 0
      %v581 = vcvt.s32.f32 %v565
      %v582 = vcvt.s32.f32 %v566
      %v583 = vcvt.s32.f32 %v567
      %v584 = vcvt.s32.f32 %v568
      %v585 = vcvt.s32.f32 %v569
      %v586 = vcvt.s32.f32 %v570
      %v587 = vcvt.s32.f32 %v571
      %v588 = vcvt.s32.f32 %v572
      %v589 = vcvt.s32.f32 %v573
      %v590 = vcvt.s32.f32 %v574
      %v591 = vcvt.s32.f32 %v575
      %v592 = vcvt.s32.f32 %v576
      %v593 = vcvt.s32.f32 %v577
      %v594 = vcvt.s32.f32 %v578
      %v595 = vcvt.s32.f32 %v579
      %v596 = vcvt.s32.f32 %v580
      %v597 = vadd.f32 %v485, %v581
      %v598 = vadd.f32 %v486, %v582
      %v599 = vadd.f32 %v487, %v583
      %v600 = vadd.f32 %v488, %v584
      %v601 = vadd.f32 %v489, %v585
      %v602 = vadd.f32 %v490, %v586
      %v603 = vadd.f32 %v491, %v587
      %v604 = vadd.f32 %v492, %v588
      %v605 = vadd.f32 %v493, %v589
      %v606 = vadd.f32 %v494, %v590
      %v607 = vadd.f32 %v495, %v591
      %v608 = vadd.f32 %v496, %v592
      %v609 = vadd.f32 %v497, %v593
      %v610 = vadd.f32 %v498, %v594
      %v611 = vadd.f32 %v499, %v595
      %v612 = vadd.f32 %v500, %v596
      %613 = vset.pattern.permute.xlu0 2
      %614 = vperm.xlu0 %613, %v387
      %v615 = vpop.permute.xlu0 %614
      %616 = vset.pattern.permute.xlu0 2
      %617 = vperm.xlu0 %616, %v388
      %v618 = vpop.permute.xlu0 %617
      %619 = vset.pattern.permute.xlu0 2
      %620 = vperm.xlu0 %619, %v389
      %v621 = vpop.permute.xlu0 %620
      %622 = vset.pattern.permute.xlu0 2
      %623 = vperm.xlu0 %622, %v390
      %v624 = vpop.permute.xlu0 %623
      %625 = vset.pattern.permute.xlu0 2
      %626 = vperm.xlu0 %625, %v391
      %v627 = vpop.permute.xlu0 %626
      %628 = vset.pattern.permute.xlu0 2
      %629 = vperm.xlu0 %628, %v392
      %v630 = vpop.permute.xlu0 %629
      %631 = vset.pattern.permute.xlu0 2
      %632 = vperm.xlu0 %631, %v393
      %v633 = vpop.permute.xlu0 %632
      %634 = vset.pattern.permute.xlu0 2
      %635 = vperm.xlu0 %634, %v394
      %v636 = vpop.permute.xlu0 %635
      %637 = vset.pattern.permute.xlu0 2
      %638 = vperm.xlu0 %637, %v395
      %v639 = vpop.permute.xlu0 %638
      %640 = vset.pattern.permute.xlu0 2
      %641 = vperm.xlu0 %640, %v396
      %v642 = vpop.permute.xlu0 %641
      %643 = vset.pattern.permute.xlu0 2
      %644 = vperm.xlu0 %643, %v397
      %v645 = vpop.permute.xlu0 %644
      %646 = vset.pattern.permute.xlu0 2
      %647 = vperm.xlu0 %646, %v398
      %v648 = vpop.permute.xlu0 %647
      %649 = vset.pattern.permute.xlu0 2
      %650 = vperm.xlu0 %649, %v399
      %v651 = vpop.permute.xlu0 %650
      %652 = vset.pattern.permute.xlu0 2
      %653 = vperm.xlu0 %652, %v400
      %v654 = vpop.permute.xlu0 %653
      %655 = vset.pattern.permute.xlu0 2
      %656 = vperm.xlu0 %655, %v401
      %v657 = vpop.permute.xlu0 %656
      %658 = vset.pattern.permute.xlu0 2
      %659 = vperm.xlu0 %658, %v402
      %v660 = vpop.permute.xlu0 %659
      %vm661 = vcmp.eq.s32.totalorder %v404, %v615
      %vm662 = vcmp.eq.s32.totalorder %v404, %v618
      %vm663 = vcmp.eq.s32.totalorder %v404, %v621
      %vm664 = vcmp.eq.s32.totalorder %v404, %v624
      %vm665 = vcmp.eq.s32.totalorder %v404, %v627
      %vm666 = vcmp.eq.s32.totalorder %v404, %v630
      %vm667 = vcmp.eq.s32.totalorder %v404, %v633
      %vm668 = vcmp.eq.s32.totalorder %v404, %v636
      %vm669 = vcmp.eq.s32.totalorder %v404, %v639
      %vm670 = vcmp.eq.s32.totalorder %v404, %v642
      %vm671 = vcmp.eq.s32.totalorder %v404, %v645
      %vm672 = vcmp.eq.s32.totalorder %v404, %v648
      %vm673 = vcmp.eq.s32.totalorder %v404, %v651
      %vm674 = vcmp.eq.s32.totalorder %v404, %v654
      %vm675 = vcmp.eq.s32.totalorder %v404, %v657
      %vm676 = vcmp.eq.s32.totalorder %v404, %v660
      %v677 = vsel %vm661, 1, 0
      %v678 = vsel %vm662, 1, 0
      %v679 = vsel %vm663, 1, 0
      %v680 = vsel %vm664, 1, 0
      %v681 = vsel %vm665, 1, 0
      %v682 = vsel %vm666, 1, 0
      %v683 = vsel %vm667, 1, 0
      %v684 = vsel %vm668, 1, 0
      %v685 = vsel %vm669, 1, 0
      %v686 = vsel %vm670, 1, 0
      %v687 = vsel %vm671, 1, 0
      %v688 = vsel %vm672, 1, 0
      %v689 = vsel %vm673, 1, 0
      %v690 = vsel %vm674, 1, 0
      %v691 = vsel %vm675, 1, 0
      %v692 = vsel %vm676, 1, 0
      %v693 = vcvt.s32.f32 %v677
      %v694 = vcvt.s32.f32 %v678
      %v695 = vcvt.s32.f32 %v679
      %v696 = vcvt.s32.f32 %v680
      %v697 = vcvt.s32.f32 %v681
      %v698 = vcvt.s32.f32 %v682
      %v699 = vcvt.s32.f32 %v683
      %v700 = vcvt.s32.f32 %v684
      %v701 = vcvt.s32.f32 %v685
      %v702 = vcvt.s32.f32 %v686
      %v703 = vcvt.s32.f32 %v687
      %v704 = vcvt.s32.f32 %v688
      %v705 = vcvt.s32.f32 %v689
      %v706 = vcvt.s32.f32 %v690
      %v707 = vcvt.s32.f32 %v691
      %v708 = vcvt.s32.f32 %v692
      %v709 = vadd.f32 %v597, %v693
      %v710 = vadd.f32 %v598, %v694
      %v711 = vadd.f32 %v599, %v695
      %v712 = vadd.f32 %v600, %v696
      %v713 = vadd.f32 %v601, %v697
      %v714 = vadd.f32 %v602, %v698
      %v715 = vadd.f32 %v603, %v699
      %v716 = vadd.f32 %v604, %v700
      %v717 = vadd.f32 %v605, %v701
      %v718 = vadd.f32 %v606, %v702
      %v719 = vadd.f32 %v607, %v703
      %v720 = vadd.f32 %v608, %v704
      %v721 = vadd.f32 %v609, %v705
      %v722 = vadd.f32 %v610, %v706
      %v723 = vadd.f32 %v611, %v707
      %v724 = vadd.f32 %v612, %v708
      %725 = vset.pattern.permute.xlu0 3
      %726 = vperm.xlu0 %725, %v387
      %v727 = vpop.permute.xlu0 %726
      %728 = vset.pattern.permute.xlu0 3
      %729 = vperm.xlu0 %728, %v388
      %v730 = vpop.permute.xlu0 %729
      %731 = vset.pattern.permute.xlu0 3
      %732 = vperm.xlu0 %731, %v389
      %v733 = vpop.permute.xlu0 %732
      %734 = vset.pattern.permute.xlu0 3
      %735 = vperm.xlu0 %734, %v390
      %v736 = vpop.permute.xlu0 %735
      %737 = vset.pattern.permute.xlu0 3
      %738 = vperm.xlu0 %737, %v391
      %v739 = vpop.permute.xlu0 %738
      %740 = vset.pattern.permute.xlu0 3
      %741 = vperm.xlu0 %740, %v392
      %v742 = vpop.permute.xlu0 %741
      %743 = vset.pattern.permute.xlu0 3
      %744 = vperm.xlu0 %743, %v393
      %v745 = vpop.permute.xlu0 %744
      %746 = vset.pattern.permute.xlu0 3
      %747 = vperm.xlu0 %746, %v394
      %v748 = vpop.permute.xlu0 %747
      %749 = vset.pattern.permute.xlu0 3
      %750 = vperm.xlu0 %749, %v395
      %v751 = vpop.permute.xlu0 %750
      %752 = vset.pattern.permute.xlu0 3
      %753 = vperm.xlu0 %752, %v396
      %v754 = vpop.permute.xlu0 %753
      %755 = vset.pattern.permute.xlu0 3
      %756 = vperm.xlu0 %755, %v397
      %v757 = vpop.permute.xlu0 %756
      %758 = vset.pattern.permute.xlu0 3
      %759 = vperm.xlu0 %758, %v398
      %v760 = vpop.permute.xlu0 %759
      %761 = vset.pattern.permute.xlu0 3
      %762 = vperm.xlu0 %761, %v399
      %v763 = vpop.permute.xlu0 %762
      %764 = vset.pattern.permute.xlu0 3
      %765 = vperm.xlu0 %764, %v400
      %v766 = vpop.permute.xlu0 %765
      %767 = vset.pattern.permute.xlu0 3
      %768 = vperm.xlu0 %767, %v401
      %v769 = vpop.permute.xlu0 %768
      %770 = vset.pattern.permute.xlu0 3
      %771 = vperm.xlu0 %770, %v402
      %v772 = vpop.permute.xlu0 %771
      %vm773 = vcmp.eq.s32.totalorder %v404, %v727
      %vm774 = vcmp.eq.s32.totalorder %v404, %v730
      %vm775 = vcmp.eq.s32.totalorder %v404, %v733
      %vm776 = vcmp.eq.s32.totalorder %v404, %v736
      %vm777 = vcmp.eq.s32.totalorder %v404, %v739
      %vm778 = vcmp.eq.s32.totalorder %v404, %v742
      %vm779 = vcmp.eq.s32.totalorder %v404, %v745
      %vm780 = vcmp.eq.s32.totalorder %v404, %v748
      %vm781 = vcmp.eq.s32.totalorder %v404, %v751
      %vm782 = vcmp.eq.s32.totalorder %v404, %v754
      %vm783 = vcmp.eq.s32.totalorder %v404, %v757
      %vm784 = vcmp.eq.s32.totalorder %v404, %v760
      %vm785 = vcmp.eq.s32.totalorder %v404, %v763
      %vm786 = vcmp.eq.s32.totalorder %v404, %v766
      %vm787 = vcmp.eq.s32.totalorder %v404, %v769
      %vm788 = vcmp.eq.s32.totalorder %v404, %v772
      %v789 = vsel %vm773, 1, 0
      %v790 = vsel %vm774, 1, 0
      %v791 = vsel %vm775, 1, 0
      %v792 = vsel %vm776, 1, 0
      %v793 = vsel %vm777, 1, 0
      %v794 = vsel %vm778, 1, 0
      %v795 = vsel %vm779, 1, 0
      %v796 = vsel %vm780, 1, 0
      %v797 = vsel %vm781, 1, 0
      %v798 = vsel %vm782, 1, 0
      %v799 = vsel %vm783, 1, 0
      %v800 = vsel %vm784, 1, 0
      %v801 = vsel %vm785, 1, 0
      %v802 = vsel %vm786, 1, 0
      %v803 = vsel %vm787, 1, 0
      %v804 = vsel %vm788, 1, 0
      %v805 = vcvt.s32.f32 %v789
      %v806 = vcvt.s32.f32 %v790
      %v807 = vcvt.s32.f32 %v791
      %v808 = vcvt.s32.f32 %v792
      %v809 = vcvt.s32.f32 %v793
      %v810 = vcvt.s32.f32 %v794
      %v811 = vcvt.s32.f32 %v795
      %v812 = vcvt.s32.f32 %v796
      %v813 = vcvt.s32.f32 %v797
      %v814 = vcvt.s32.f32 %v798
      %v815 = vcvt.s32.f32 %v799
      %v816 = vcvt.s32.f32 %v800
      %v817 = vcvt.s32.f32 %v801
      %v818 = vcvt.s32.f32 %v802
      %v819 = vcvt.s32.f32 %v803
      %v820 = vcvt.s32.f32 %v804
      %v821 = vadd.f32 %v709, %v805
      %v822 = vadd.f32 %v710, %v806
      %v823 = vadd.f32 %v711, %v807
      %v824 = vadd.f32 %v712, %v808
      %v825 = vadd.f32 %v713, %v809
      %v826 = vadd.f32 %v714, %v810
      %v827 = vadd.f32 %v715, %v811
      %v828 = vadd.f32 %v716, %v812
      %v829 = vadd.f32 %v717, %v813
      %v830 = vadd.f32 %v718, %v814
      %v831 = vadd.f32 %v719, %v815
      %v832 = vadd.f32 %v720, %v816
      %v833 = vadd.f32 %v721, %v817
      %v834 = vadd.f32 %v722, %v818
      %v835 = vadd.f32 %v723, %v819
      %v836 = vadd.f32 %v724, %v820
      %v837 = vld [vmem:[%s1] sm:$0xff]
      %v838 = vld [vmem:[%s1 + $0x8] sm:$0xff]
      %v839 = vld [vmem:[%s1 + $0x10] sm:$0xff]
      %v840 = vld [vmem:[%s1 + $0x18] sm:$0xff]
      %v841 = vld [vmem:[%s1 + $0x20] sm:$0xff]
      %v842 = vld [vmem:[%s1 + $0x28] sm:$0xff]
      %v843 = vld [vmem:[%s1 + $0x30] sm:$0xff]
      %v844 = vld [vmem:[%s1 + $0x38] sm:$0xff]
      %v845 = vld [vmem:[%s1 + $0x40] sm:$0xff]
      %v846 = vld [vmem:[%s1 + $0x48] sm:$0xff]
      %v847 = vld [vmem:[%s1 + $0x50] sm:$0xff]
      %v848 = vld [vmem:[%s1 + $0x58] sm:$0xff]
      %v849 = vld [vmem:[%s1 + $0x60] sm:$0xff]
      %v850 = vld [vmem:[%s1 + $0x68] sm:$0xff]
      %v851 = vld [vmem:[%s1 + $0x70] sm:$0xff]
      %v852 = vld [vmem:[%s1 + $0x78] sm:$0xff]
      %853 = vmatprep.subr.mxu0 0.0
      %854 = vmatpush1.msra.mxu0 %v837
      %855 = vmatprep.subr.mxu0 0.0
      %856 = vmatpush1.msra.mxu0 %v838
      %857 = vmatprep.subr.mxu0 0.0
      %858 = vmatpush1.msra.mxu0 %v839
      %859 = vmatprep.subr.mxu0 0.0
      %860 = vmatpush1.msra.mxu0 %v840
      %861 = vmatprep.subr.mxu0 0.0
      %862 = vmatpush1.msra.mxu0 %v841
      %863 = vmatprep.subr.mxu0 0.0
      %864 = vmatpush1.msra.mxu0 %v842
      %865 = vmatprep.subr.mxu0 0.0
      %866 = vmatpush1.msra.mxu0 %v843
      %867 = vmatprep.subr.mxu0 0.0
      %868 = vmatpush1.msra.mxu0 %v844
      %869 = vmatprep.subr.mxu0 0.0
      %870 = vmatpush1.msra.mxu0 %v845
      %871 = vmatprep.subr.mxu0 0.0
      %872 = vmatpush1.msra.mxu0 %v846
      %873 = vmatprep.subr.mxu0 0.0
      %874 = vmatpush1.msra.mxu0 %v847
      %875 = vmatprep.subr.mxu0 0.0
      %876 = vmatpush1.msra.mxu0 %v848
      %877 = vmatprep.subr.mxu0 0.0
      %878 = vmatpush1.msra.mxu0 %v849
      %879 = vmatprep.subr.mxu0 0.0
      %880 = vmatpush1.msra.mxu0 %v850
      %881 = vmatprep.subr.mxu0 0.0
      %882 = vmatpush1.msra.mxu0 %v851
      %883 = vmatprep.subr.mxu0 0.0
      %884 = vmatpush1.msra.mxu0 %v852
      %885 = vmatprep.subr.mxu0 0.0
      %886 = vmatpush1.msra.mxu0 0.0
      %887 = vmatprep.subr.mxu0 0.0
      %888 = vmatpush1.msra.mxu0 0.0
      %889 = vmatprep.subr.mxu0 0.0
      %890 = vmatpush1.msra.mxu0 0.0
      %891 = vmatprep.subr.mxu0 0.0
      %892 = vmatpush1.msra.mxu0 0.0
      %893 = vmatprep.subr.mxu0 0.0
      %894 = vmatpush1.msra.mxu0 0.0
      %895 = vmatprep.subr.mxu0 0.0
      %896 = vmatpush1.msra.mxu0 0.0
      %897 = vmatprep.subr.mxu0 0.0
      %898 = vmatpush1.msra.mxu0 0.0
      %899 = vmatprep.subr.mxu0 0.0
      %900 = vmatpush1.msra.mxu0 0.0
      %901 = vmatprep.subr.mxu0 0.0
      %902 = vmatpush1.msra.mxu0 0.0
      %903 = vmatprep.subr.mxu0 0.0
      %904 = vmatpush1.msra.mxu0 0.0
      %905 = vmatprep.subr.mxu0 0.0
      %906 = vmatpush1.msra.mxu0 0.0
      %907 = vmatprep.subr.mxu0 0.0
      %908 = vmatpush1.msra.mxu0 0.0
      %909 = vmatprep.subr.mxu0 0.0
      %910 = vmatpush1.msra.mxu0 0.0
      %911 = vmatprep.subr.mxu0 0.0
      %912 = vmatpush1.msra.mxu0 0.0
      %913 = vmatprep.subr.mxu0 0.0
      %914 = vmatpush1.msra.mxu0 0.0
      %915 = vmatprep.subr.mxu0 0.0
      %916 = vmatpush1.msra.mxu0 0.0
      %917 = vmatprep.mubr.f32.mxu0 0.0
      %918 = vmatmul.mubr.f32.gmra.mrb[0].mxu0 %v821
      %v919 = vpop.f32.mrb[0].mxu0
      %v920 = vadd.f32 0.0, %v919
      %v921 = vpop.f32.mrb[0].mxu0
      %922 = vmatprep.mubr.f32.mxu0 0.0
      %923 = vmatmul.mubr.f32.gmra.mrb[0].mxu0 %v822
      %v924 = vpop.f32.mrb[0].mxu0
      %v925 = vadd.f32 0.0, %v924
      %v926 = vpop.f32.mrb[0].mxu0
      %927 = vmatprep.mubr.f32.mxu0 0.0
      %928 = vmatmul.mubr.f32.gmra.mrb[0].mxu0 %v823
      %v929 = vpop.f32.mrb[0].mxu0
      %v930 = vadd.f32 0.0, %v929
      %v931 = vpop.f32.mrb[0].mxu0
      %932 = vmatprep.mubr.f32.mxu0 0.0
      %933 = vmatmul.mubr.f32.gmra.mrb[0].mxu0 %v824
      %v934 = vpop.f32.mrb[0].mxu0
      %v935 = vadd.f32 0.0, %v934
      %v936 = vpop.f32.mrb[0].mxu0
      %937 = vmatprep.mubr.f32.mxu0 0.0
      %938 = vmatmul.mubr.f32.gmra.mrb[0].mxu0 %v825
      %v939 = vpop.f32.mrb[0].mxu0
      %v940 = vadd.f32 0.0, %v939
      %v941 = vpop.f32.mrb[0].mxu0
      %942 = vmatprep.mubr.f32.mxu0 0.0
      %943 = vmatmul.mubr.f32.gmra.mrb[0].mxu0 %v826
      %v944 = vpop.f32.mrb[0].mxu0
      %v945 = vadd.f32 0.0, %v944
      %v946 = vpop.f32.mrb[0].mxu0
      %947 = vmatprep.mubr.f32.mxu0 0.0
      %948 = vmatmul.mubr.f32.gmra.mrb[0].mxu0 %v827
      %v949 = vpop.f32.mrb[0].mxu0
      %v950 = vadd.f32 0.0, %v949
      %v951 = vpop.f32.mrb[0].mxu0
      %952 = vmatprep.mubr.f32.mxu0 0.0
      %953 = vmatmul.mubr.f32.gmra.mrb[0].mxu0 %v828
      %v954 = vpop.f32.mrb[0].mxu0
      %v955 = vadd.f32 0.0, %v954
      %v956 = vpop.f32.mrb[0].mxu0
      %957 = vmatprep.mubr.f32.mxu0 0.0
      %958 = vmatmul.mubr.f32.gmra.mrb[0].mxu0 %v829
      %v959 = vpop.f32.mrb[0].mxu0
      %v960 = vadd.f32 0.0, %v959
      %v961 = vpop.f32.mrb[0].mxu0
      %962 = vmatprep.mubr.f32.mxu0 0.0
      %963 = vmatmul.mubr.f32.gmra.mrb[0].mxu0 %v830
      %v964 = vpop.f32.mrb[0].mxu0
      %v965 = vadd.f32 0.0, %v964
      %v966 = vpop.f32.mrb[0].mxu0
      %967 = vmatprep.mubr.f32.mxu0 0.0
      %968 = vmatmul.mubr.f32.gmra.mrb[0].mxu0 %v831
      %v969 = vpop.f32.mrb[0].mxu0
      %v970 = vadd.f32 0.0, %v969
      %v971 = vpop.f32.mrb[0].mxu0
      %972 = vmatprep.mubr.f32.mxu0 0.0
      %973 = vmatmul.mubr.f32.gmra.mrb[0].mxu0 %v832
      %v974 = vpop.f32.mrb[0].mxu0
      %v975 = vadd.f32 0.0, %v974
      %v976 = vpop.f32.mrb[0].mxu0
      %977 = vmatprep.mubr.f32.mxu0 0.0
      %978 = vmatmul.mubr.f32.gmra.mrb[0].mxu0 %v833
      %v979 = vpop.f32.mrb[0].mxu0
      %v980 = vadd.f32 0.0, %v979
      %v981 = vpop.f32.mrb[0].mxu0
      %982 = vmatprep.mubr.f32.mxu0 0.0
      %983 = vmatmul.mubr.f32.gmra.mrb[0].mxu0 %v834
      %v984 = vpop.f32.mrb[0].mxu0
      %v985 = vadd.f32 0.0, %v984
      %v986 = vpop.f32.mrb[0].mxu0
      %987 = vmatprep.mubr.f32.mxu0 0.0
      %988 = vmatmul.mubr.f32.gmra.mrb[0].mxu0 %v835
      %v989 = vpop.f32.mrb[0].mxu0
      %v990 = vadd.f32 0.0, %v989
      %v991 = vpop.f32.mrb[0].mxu0
      %992 = vmatprep.mubr.f32.mxu0 0.0
      %993 = vmatmul.mubr.f32.gmra.mrb[0].mxu0 %v836
      %v994 = vpop.f32.mrb[0].mxu0
      %v995 = vadd.f32 0.0, %v994
      %v996 = vpop.f32.mrb[0].mxu0
      %997 = vdwg.mxu0
      %v998 = vld [vmem:[%s4] sm:$0xff]
      %v999 = vld [vmem:[%s4 + $0x8] sm:$0xff]
      %v1000 = vld [vmem:[%s4 + $0x10] sm:$0xff]
      %v1001 = vld [vmem:[%s4 + $0x18] sm:$0xff]
      %v1002 = vld [vmem:[%s4 + $0x20] sm:$0xff]
      %v1003 = vld [vmem:[%s4 + $0x28] sm:$0xff]
      %v1004 = vld [vmem:[%s4 + $0x30] sm:$0xff]
      %v1005 = vld [vmem:[%s4 + $0x38] sm:$0xff]
      %v1006 = vld [vmem:[%s4 + $0x40] sm:$0xff]
      %v1007 = vld [vmem:[%s4 + $0x48] sm:$0xff]
      %v1008 = vld [vmem:[%s4 + $0x50] sm:$0xff]
      %v1009 = vld [vmem:[%s4 + $0x58] sm:$0xff]
      %v1010 = vld [vmem:[%s4 + $0x60] sm:$0xff]
      %v1011 = vld [vmem:[%s4 + $0x68] sm:$0xff]
      %v1012 = vld [vmem:[%s4 + $0x70] sm:$0xff]
      %v1013 = vld [vmem:[%s4 + $0x78] sm:$0xff]
      %v1014 = vld [vmem:[%s5] sm:$0x1]
      %v1016 = vlaneseq
      %v1017 = vshrl.u32 %v1016, 7
      %v1018 = vsub.s32 0, %v1017
      %v1019 = vrot.slane %v1014, %v1018
      %1021 = vmatprep.subr.mxu0 0.0
      %1022 = vmatpush1.msra.mxu0 %v998
      %1023 = vmatprep.subr.mxu0 0.0
      %1024 = vmatpush1.msra.mxu0 %v999
      %1025 = vmatprep.subr.mxu0 0.0
      %1026 = vmatpush1.msra.mxu0 %v1000
      %1027 = vmatprep.subr.mxu0 0.0
      %1028 = vmatpush1.msra.mxu0 %v1001
      %1029 = vmatprep.subr.mxu0 0.0
      %1030 = vmatpush1.msra.mxu0 %v1002
      %1031 = vmatprep.subr.mxu0 0.0
      %1032 = vmatpush1.msra.mxu0 %v1003
      %1033 = vmatprep.subr.mxu0 0.0
      %1034 = vmatpush1.msra.mxu0 %v1004
      %1035 = vmatprep.subr.mxu0 0.0
      %1036 = vmatpush1.msra.mxu0 %v1005
      %1037 = vmatprep.subr.mxu0 0.0
      %1038 = vmatpush1.msra.mxu0 %v1006
      %1039 = vmatprep.subr.mxu0 0.0
      %1040 = vmatpush1.msra.mxu0 %v1007
      %1041 = vmatprep.subr.mxu0 0.0
      %1042 = vmatpush1.msra.mxu0 %v1008
      %1043 = vmatprep.subr.mxu0 0.0
      %1044 = vmatpush1.msra.mxu0 %v1009
      %1045 = vmatprep.subr.mxu0 0.0
      %1046 = vmatpush1.msra.mxu0 %v1010
      %1047 = vmatprep.subr.mxu0 0.0
      %1048 = vmatpush1.msra.mxu0 %v1011
      %1049 = vmatprep.subr.mxu0 0.0
      %1050 = vmatpush1.msra.mxu0 %v1012
      %1051 = vmatprep.subr.mxu0 0.0
      %1052 = vmatpush1.msra.mxu0 %v1013
      %1053 = vmatprep.subr.mxu0 0.0
      %1054 = vmatpush1.msra.mxu0 0.0
      %1055 = vmatprep.subr.mxu0 0.0
      %1056 = vmatpush1.msra.mxu0 0.0
      %1057 = vmatprep.subr.mxu0 0.0
      %1058 = vmatpush1.msra.mxu0 0.0
      %1059 = vmatprep.subr.mxu0 0.0
      %1060 = vmatpush1.msra.mxu0 0.0
      %1061 = vmatprep.subr.mxu0 0.0
      %1062 = vmatpush1.msra.mxu0 0.0
      %1063 = vmatprep.subr.mxu0 0.0
      %1064 = vmatpush1.msra.mxu0 0.0
      %1065 = vmatprep.subr.mxu0 0.0
      %1066 = vmatpush1.msra.mxu0 0.0
      %1067 = vmatprep.subr.mxu0 0.0
      %1068 = vmatpush1.msra.mxu0 0.0
      %1069 = vmatprep.subr.mxu0 0.0
      %1070 = vmatpush1.msra.mxu0 0.0
      %1071 = vmatprep.subr.mxu0 0.0
      %1072 = vmatpush1.msra.mxu0 0.0
      %1073 = vmatprep.subr.mxu0 0.0
      %1074 = vmatpush1.msra.mxu0 0.0
      %1075 = vmatprep.subr.mxu0 0.0
      %1076 = vmatpush1.msra.mxu0 0.0
      %1077 = vmatprep.subr.mxu0 0.0
      %1078 = vmatpush1.msra.mxu0 0.0
      %1079 = vmatprep.subr.mxu0 0.0
      %1080 = vmatpush1.msra.mxu0 0.0
      %1081 = vmatprep.subr.mxu0 0.0
      %1082 = vmatpush1.msra.mxu0 0.0
      %1083 = vmatprep.subr.mxu0 0.0
      %1084 = vmatpush1.msra.mxu0 0.0
      %1085 = vmatprep.mubr.f32.mxu0 0.0
      %1086 = vmatmul.mubr.f32.gmra.mrb[0].mxu0 %v920
      %v1087 = vpop.f32.mrb[0].mxu0
      %v1088 = vadd.f32 %v1019, %v1087
      %v1089 = vpop.f32.mrb[0].mxu0
      %1090 = vmatprep.mubr.f32.mxu0 0.0
      %1091 = vmatmul.mubr.f32.gmra.mrb[0].mxu0 %v925
      %v1092 = vpop.f32.mrb[0].mxu0
      %v1093 = vadd.f32 %v1019, %v1092
      %v1094 = vpop.f32.mrb[0].mxu0
      %1095 = vmatprep.mubr.f32.mxu0 0.0
      %1096 = vmatmul.mubr.f32.gmra.mrb[0].mxu0 %v930
      %v1097 = vpop.f32.mrb[0].mxu0
      %v1098 = vadd.f32 %v1019, %v1097
      %v1099 = vpop.f32.mrb[0].mxu0
      %1100 = vmatprep.mubr.f32.mxu0 0.0
      %1101 = vmatmul.mubr.f32.gmra.mrb[0].mxu0 %v935
      %v1102 = vpop.f32.mrb[0].mxu0
      %v1103 = vadd.f32 %v1019, %v1102
      %v1104 = vpop.f32.mrb[0].mxu0
      %1105 = vmatprep.mubr.f32.mxu0 0.0
      %1106 = vmatmul.mubr.f32.gmra.mrb[0].mxu0 %v940
      %v1107 = vpop.f32.mrb[0].mxu0
      %v1108 = vadd.f32 %v1019, %v1107
      %v1109 = vpop.f32.mrb[0].mxu0
      %1110 = vmatprep.mubr.f32.mxu0 0.0
      %1111 = vmatmul.mubr.f32.gmra.mrb[0].mxu0 %v945
      %v1112 = vpop.f32.mrb[0].mxu0
      %v1113 = vadd.f32 %v1019, %v1112
      %v1114 = vpop.f32.mrb[0].mxu0
      %1115 = vmatprep.mubr.f32.mxu0 0.0
      %1116 = vmatmul.mubr.f32.gmra.mrb[0].mxu0 %v950
      %v1117 = vpop.f32.mrb[0].mxu0
      %v1118 = vadd.f32 %v1019, %v1117
      %v1119 = vpop.f32.mrb[0].mxu0
      %1120 = vmatprep.mubr.f32.mxu0 0.0
      %1121 = vmatmul.mubr.f32.gmra.mrb[0].mxu0 %v955
      %v1122 = vpop.f32.mrb[0].mxu0
      %v1123 = vadd.f32 %v1019, %v1122
      %v1124 = vpop.f32.mrb[0].mxu0
      %1125 = vmatprep.mubr.f32.mxu0 0.0
      %1126 = vmatmul.mubr.f32.gmra.mrb[0].mxu0 %v960
      %v1127 = vpop.f32.mrb[0].mxu0
      %v1128 = vadd.f32 %v1019, %v1127
      %v1129 = vpop.f32.mrb[0].mxu0
      %1130 = vmatprep.mubr.f32.mxu0 0.0
      %1131 = vmatmul.mubr.f32.gmra.mrb[0].mxu0 %v965
      %v1132 = vpop.f32.mrb[0].mxu0
      %v1133 = vadd.f32 %v1019, %v1132
      %v1134 = vpop.f32.mrb[0].mxu0
      %1135 = vmatprep.mubr.f32.mxu0 0.0
      %1136 = vmatmul.mubr.f32.gmra.mrb[0].mxu0 %v970
      %v1137 = vpop.f32.mrb[0].mxu0
      %v1138 = vadd.f32 %v1019, %v1137
      %v1139 = vpop.f32.mrb[0].mxu0
      %1140 = vmatprep.mubr.f32.mxu0 0.0
      %1141 = vmatmul.mubr.f32.gmra.mrb[0].mxu0 %v975
      %v1142 = vpop.f32.mrb[0].mxu0
      %v1143 = vadd.f32 %v1019, %v1142
      %v1144 = vpop.f32.mrb[0].mxu0
      %1145 = vmatprep.mubr.f32.mxu0 0.0
      %1146 = vmatmul.mubr.f32.gmra.mrb[0].mxu0 %v980
      %v1147 = vpop.f32.mrb[0].mxu0
      %v1148 = vadd.f32 %v1019, %v1147
      %v1149 = vpop.f32.mrb[0].mxu0
      %1150 = vmatprep.mubr.f32.mxu0 0.0
      %1151 = vmatmul.mubr.f32.gmra.mrb[0].mxu0 %v985
      %v1152 = vpop.f32.mrb[0].mxu0
      %v1153 = vadd.f32 %v1019, %v1152
      %v1154 = vpop.f32.mrb[0].mxu0
      %1155 = vmatprep.mubr.f32.mxu0 0.0
      %1156 = vmatmul.mubr.f32.gmra.mrb[0].mxu0 %v990
      %v1157 = vpop.f32.mrb[0].mxu0
      %v1158 = vadd.f32 %v1019, %v1157
      %v1159 = vpop.f32.mrb[0].mxu0
      %1160 = vmatprep.mubr.f32.mxu0 0.0
      %1161 = vmatmul.mubr.f32.gmra.mrb[0].mxu0 %v995
      %v1162 = vpop.f32.mrb[0].mxu0
      %v1163 = vadd.f32 %v1019, %v1162
      %v1164 = vpop.f32.mrb[0].mxu0
      %1165 = vdwg.mxu0
      %v1166 = vmax.f32 %v1088, 0.0
      %v1167 = vmax.f32 %v1093, 0.0
      %v1168 = vmax.f32 %v1098, 0.0
      %v1169 = vmax.f32 %v1103, 0.0
      %v1170 = vmax.f32 %v1108, 0.0
      %v1171 = vmax.f32 %v1113, 0.0
      %v1172 = vmax.f32 %v1118, 0.0
      %v1173 = vmax.f32 %v1123, 0.0
      %v1174 = vmax.f32 %v1128, 0.0
      %v1175 = vmax.f32 %v1133, 0.0
      %v1176 = vmax.f32 %v1138, 0.0
      %v1177 = vmax.f32 %v1143, 0.0
      %v1178 = vmax.f32 %v1148, 0.0
      %v1179 = vmax.f32 %v1153, 0.0
      %v1180 = vmax.f32 %v1158, 0.0
      %v1181 = vmax.f32 %v1163, 0.0
      %v1182 = vld [vmem:[%s6] sm:$0xff]
      %v1183 = vld [vmem:[%s6 + $0x8] sm:$0xff]
      %v1184 = vld [vmem:[%s6 + $0x10] sm:$0xff]
      %v1185 = vld [vmem:[%s6 + $0x18] sm:$0xff]
      %v1186 = vld [vmem:[%s6 + $0x20] sm:$0xff]
      %v1187 = vld [vmem:[%s6 + $0x28] sm:$0xff]
      %v1188 = vld [vmem:[%s6 + $0x30] sm:$0xff]
      %v1189 = vld [vmem:[%s6 + $0x38] sm:$0xff]
      %v1190 = vld [vmem:[%s6 + $0x40] sm:$0xff]
      %v1191 = vld [vmem:[%s6 + $0x48] sm:$0xff]
      %v1192 = vld [vmem:[%s6 + $0x50] sm:$0xff]
      %v1193 = vld [vmem:[%s6 + $0x58] sm:$0xff]
      %v1194 = vld [vmem:[%s6 + $0x60] sm:$0xff]
      %v1195 = vld [vmem:[%s6 + $0x68] sm:$0xff]
      %v1196 = vld [vmem:[%s6 + $0x70] sm:$0xff]
      %v1197 = vld [vmem:[%s6 + $0x78] sm:$0xff]
      %v1198 = vld [vmem:[%s7] sm:$0x1]
      %v1200 = vlaneseq
      %v1201 = vshrl.u32 %v1200, 7
      %v1202 = vsub.s32 0, %v1201
      %v1203 = vrot.slane %v1198, %v1202
      %1205 = vmatprep.subr.mxu0 0.0
      %1206 = vmatpush1.msra.mxu0 %v1182
      %1207 = vmatprep.subr.mxu0 0.0
      %1208 = vmatpush1.msra.mxu0 %v1183
      %1209 = vmatprep.subr.mxu0 0.0
      %1210 = vmatpush1.msra.mxu0 %v1184
      %1211 = vmatprep.subr.mxu0 0.0
      %1212 = vmatpush1.msra.mxu0 %v1185
      %1213 = vmatprep.subr.mxu0 0.0
      %1214 = vmatpush1.msra.mxu0 %v1186
      %1215 = vmatprep.subr.mxu0 0.0
      %1216 = vmatpush1.msra.mxu0 %v1187
      %1217 = vmatprep.subr.mxu0 0.0
      %1218 = vmatpush1.msra.mxu0 %v1188
      %1219 = vmatprep.subr.mxu0 0.0
      %1220 = vmatpush1.msra.mxu0 %v1189
      %1221 = vmatprep.subr.mxu0 0.0
      %1222 = vmatpush1.msra.mxu0 %v1190
      %1223 = vmatprep.subr.mxu0 0.0
      %1224 = vmatpush1.msra.mxu0 %v1191
      %1225 = vmatprep.subr.mxu0 0.0
      %1226 = vmatpush1.msra.mxu0 %v1192
      %1227 = vmatprep.subr.mxu0 0.0
      %1228 = vmatpush1.msra.mxu0 %v1193
      %1229 = vmatprep.subr.mxu0 0.0
      %1230 = vmatpush1.msra.mxu0 %v1194
      %1231 = vmatprep.subr.mxu0 0.0
      %1232 = vmatpush1.msra.mxu0 %v1195
      %1233 = vmatprep.subr.mxu0 0.0
      %1234 = vmatpush1.msra.mxu0 %v1196
      %1235 = vmatprep.subr.mxu0 0.0
      %1236 = vmatpush1.msra.mxu0 %v1197
      %1237 = vmatprep.subr.mxu0 0.0
      %1238 = vmatpush1.msra.mxu0 0.0
      %1239 = vmatprep.subr.mxu0 0.0
      %1240 = vmatpush1.msra.mxu0 0.0
      %1241 = vmatprep.subr.mxu0 0.0
      %1242 = vmatpush1.msra.mxu0 0.0
      %1243 = vmatprep.subr.mxu0 0.0
      %1244 = vmatpush1.msra.mxu0 0.0
      %1245 = vmatprep.subr.mxu0 0.0
      %1246 = vmatpush1.msra.mxu0 0.0
      %1247 = vmatprep.subr.mxu0 0.0
      %1248 = vmatpush1.msra.mxu0 0.0
      %1249 = vmatprep.subr.mxu0 0.0
      %1250 = vmatpush1.msra.mxu0 0.0
      %1251 = vmatprep.subr.mxu0 0.0
      %1252 = vmatpush1.msra.mxu0 0.0
      %1253 = vmatprep.subr.mxu0 0.0
      %1254 = vmatpush1.msra.mxu0 0.0
      %1255 = vmatprep.subr.mxu0 0.0
      %1256 = vmatpush1.msra.mxu0 0.0
      %1257 = vmatprep.subr.mxu0 0.0
      %1258 = vmatpush1.msra.mxu0 0.0
      %1259 = vmatprep.subr.mxu0 0.0
      %1260 = vmatpush1.msra.mxu0 0.0
      %1261 = vmatprep.subr.mxu0 0.0
      %1262 = vmatpush1.msra.mxu0 0.0
      %1263 = vmatprep.subr.mxu0 0.0
      %1264 = vmatpush1.msra.mxu0 0.0
      %1265 = vmatprep.subr.mxu0 0.0
      %1266 = vmatpush1.msra.mxu0 0.0
      %1267 = vmatprep.subr.mxu0 0.0
      %1268 = vmatpush1.msra.mxu0 0.0
      %1269 = vmatprep.mubr.f32.mxu0 0.0
      %1270 = vmatmul.mubr.f32.gmra.mrb[0].mxu0 %v1166
      %v1271 = vpop.f32.mrb[0].mxu0
      %v1272 = vadd.f32 %v1203, %v1271
      %v1273 = vpop.f32.mrb[0].mxu0
      %1274 = vmatprep.mubr.f32.mxu0 0.0
      %1275 = vmatmul.mubr.f32.gmra.mrb[0].mxu0 %v1167
      %v1276 = vpop.f32.mrb[0].mxu0
      %v1277 = vadd.f32 %v1203, %v1276
      %v1278 = vpop.f32.mrb[0].mxu0
      %1279 = vmatprep.mubr.f32.mxu0 0.0
      %1280 = vmatmul.mubr.f32.gmra.mrb[0].mxu0 %v1168
      %v1281 = vpop.f32.mrb[0].mxu0
      %v1282 = vadd.f32 %v1203, %v1281
      %v1283 = vpop.f32.mrb[0].mxu0
      %1284 = vmatprep.mubr.f32.mxu0 0.0
      %1285 = vmatmul.mubr.f32.gmra.mrb[0].mxu0 %v1169
      %v1286 = vpop.f32.mrb[0].mxu0
      %v1287 = vadd.f32 %v1203, %v1286
      %v1288 = vpop.f32.mrb[0].mxu0
      %1289 = vmatprep.mubr.f32.mxu0 0.0
      %1290 = vmatmul.mubr.f32.gmra.mrb[0].mxu0 %v1170
      %v1291 = vpop.f32.mrb[0].mxu0
      %v1292 = vadd.f32 %v1203, %v1291
      %v1293 = vpop.f32.mrb[0].mxu0
      %1294 = vmatprep.mubr.f32.mxu0 0.0
      %1295 = vmatmul.mubr.f32.gmra.mrb[0].mxu0 %v1171
      %v1296 = vpop.f32.mrb[0].mxu0
      %v1297 = vadd.f32 %v1203, %v1296
      %v1298 = vpop.f32.mrb[0].mxu0
      %1299 = vmatprep.mubr.f32.mxu0 0.0
      %1300 = vmatmul.mubr.f32.gmra.mrb[0].mxu0 %v1172
      %v1301 = vpop.f32.mrb[0].mxu0
      %v1302 = vadd.f32 %v1203, %v1301
      %v1303 = vpop.f32.mrb[0].mxu0
      %1304 = vmatprep.mubr.f32.mxu0 0.0
      %1305 = vmatmul.mubr.f32.gmra.mrb[0].mxu0 %v1173
      %v1306 = vpop.f32.mrb[0].mxu0
      %v1307 = vadd.f32 %v1203, %v1306
      %v1308 = vpop.f32.mrb[0].mxu0
      %1309 = vmatprep.mubr.f32.mxu0 0.0
      %1310 = vmatmul.mubr.f32.gmra.mrb[0].mxu0 %v1174
      %v1311 = vpop.f32.mrb[0].mxu0
      %v1312 = vadd.f32 %v1203, %v1311
      %v1313 = vpop.f32.mrb[0].mxu0
      %1314 = vmatprep.mubr.f32.mxu0 0.0
      %1315 = vmatmul.mubr.f32.gmra.mrb[0].mxu0 %v1175
      %v1316 = vpop.f32.mrb[0].mxu0
      %v1317 = vadd.f32 %v1203, %v1316
      %v1318 = vpop.f32.mrb[0].mxu0
      %1319 = vmatprep.mubr.f32.mxu0 0.0
      %1320 = vmatmul.mubr.f32.gmra.mrb[0].mxu0 %v1176
      %v1321 = vpop.f32.mrb[0].mxu0
      %v1322 = vadd.f32 %v1203, %v1321
      %v1323 = vpop.f32.mrb[0].mxu0
      %1324 = vmatprep.mubr.f32.mxu0 0.0
      %1325 = vmatmul.mubr.f32.gmra.mrb[0].mxu0 %v1177
      %v1326 = vpop.f32.mrb[0].mxu0
      %v1327 = vadd.f32 %v1203, %v1326
      %v1328 = vpop.f32.mrb[0].mxu0
      %1329 = vmatprep.mubr.f32.mxu0 0.0
      %1330 = vmatmul.mubr.f32.gmra.mrb[0].mxu0 %v1178
      %v1331 = vpop.f32.mrb[0].mxu0
      %v1332 = vadd.f32 %v1203, %v1331
      %v1333 = vpop.f32.mrb[0].mxu0
      %1334 = vmatprep.mubr.f32.mxu0 0.0
      %1335 = vmatmul.mubr.f32.gmra.mrb[0].mxu0 %v1179
      %v1336 = vpop.f32.mrb[0].mxu0
      %v1337 = vadd.f32 %v1203, %v1336
      %v1338 = vpop.f32.mrb[0].mxu0
      %1339 = vmatprep.mubr.f32.mxu0 0.0
      %1340 = vmatmul.mubr.f32.gmra.mrb[0].mxu0 %v1180
      %v1341 = vpop.f32.mrb[0].mxu0
      %v1342 = vadd.f32 %v1203, %v1341
      %v1343 = vpop.f32.mrb[0].mxu0
      %1344 = vmatprep.mubr.f32.mxu0 0.0
      %1345 = vmatmul.mubr.f32.gmra.mrb[0].mxu0 %v1181
      %v1346 = vpop.f32.mrb[0].mxu0
      %v1347 = vadd.f32 %v1203, %v1346
      %v1348 = vpop.f32.mrb[0].mxu0
      %1349 = vdwg.mxu0
      %v1350 = vmax.f32 %v1272, 0.0
      %v1351 = vmax.f32 %v1277, 0.0
      %v1352 = vmax.f32 %v1282, 0.0
      %v1353 = vmax.f32 %v1287, 0.0
      %v1354 = vmax.f32 %v1292, 0.0
      %v1355 = vmax.f32 %v1297, 0.0
      %v1356 = vmax.f32 %v1302, 0.0
      %v1357 = vmax.f32 %v1307, 0.0
      %v1358 = vmax.f32 %v1312, 0.0
      %v1359 = vmax.f32 %v1317, 0.0
      %v1360 = vmax.f32 %v1322, 0.0
      %v1361 = vmax.f32 %v1327, 0.0
      %v1362 = vmax.f32 %v1332, 0.0
      %v1363 = vmax.f32 %v1337, 0.0
      %v1364 = vmax.f32 %v1342, 0.0
      %v1365 = vmax.f32 %v1347, 0.0
      %v1366 = vld [vmem:[%s2] sm:$0x1]
      %v1367 = vld [vmem:[%s3] sm:$0x1]
      %v1368 = vlaneseq
      %v1369 = vshrl.u32 %v1368, 7
      %v1370 = vsub.s32 0, %v1369
      %v1371 = vrot.slane %v1366, %v1370
      %v1372 = vmul.f32 %v920, %v1371
      %v1373 = vmul.f32 %v925, %v1371
      %v1374 = vmul.f32 %v930, %v1371
      %v1375 = vmul.f32 %v935, %v1371
      %v1376 = vmul.f32 %v940, %v1371
      %v1377 = vmul.f32 %v945, %v1371
      %v1378 = vmul.f32 %v950, %v1371
      %v1379 = vmul.f32 %v955, %v1371
      %v1380 = vmul.f32 %v960, %v1371
      %v1381 = vmul.f32 %v965, %v1371
      %v1382 = vmul.f32 %v970, %v1371
      %v1383 = vmul.f32 %v975, %v1371
      %v1384 = vmul.f32 %v980, %v1371
      %v1385 = vmul.f32 %v985, %v1371
      %v1386 = vmul.f32 %v990, %v1371
      %v1387 = vmul.f32 %v995, %v1371
      %1388 = vadd.xlane.f32.xlu0 %v1372
      %v1389 = vpop.xlane.xlu0 %1388
      %1390 = vadd.xlane.f32.xlu0 %v1373
      %v1391 = vpop.xlane.xlu0 %1390
      %1392 = vadd.xlane.f32.xlu0 %v1374
      %v1393 = vpop.xlane.xlu0 %1392
      %1394 = vadd.xlane.f32.xlu0 %v1375
      %v1395 = vpop.xlane.xlu0 %1394
      %1396 = vadd.xlane.f32.xlu0 %v1376
      %v1397 = vpop.xlane.xlu0 %1396
      %1398 = vadd.xlane.f32.xlu0 %v1377
      %v1399 = vpop.xlane.xlu0 %1398
      %1400 = vadd.xlane.f32.xlu0 %v1378
      %v1401 = vpop.xlane.xlu0 %1400
      %1402 = vadd.xlane.f32.xlu0 %v1379
      %v1403 = vpop.xlane.xlu0 %1402
      %1404 = vadd.xlane.f32.xlu0 %v1380
      %v1405 = vpop.xlane.xlu0 %1404
      %1406 = vadd.xlane.f32.xlu0 %v1381
      %v1407 = vpop.xlane.xlu0 %1406
      %1408 = vadd.xlane.f32.xlu0 %v1382
      %v1409 = vpop.xlane.xlu0 %1408
      %1410 = vadd.xlane.f32.xlu0 %v1383
      %v1411 = vpop.xlane.xlu0 %1410
      %1412 = vadd.xlane.f32.xlu0 %v1384
      %v1413 = vpop.xlane.xlu0 %1412
      %1414 = vadd.xlane.f32.xlu0 %v1385
      %v1415 = vpop.xlane.xlu0 %1414
      %1416 = vadd.xlane.f32.xlu0 %v1386
      %v1417 = vpop.xlane.xlu0 %1416
      %1418 = vadd.xlane.f32.xlu0 %v1387
      %v1419 = vpop.xlane.xlu0 %1418
      %v1420 = vmul.f32 %v920, %v1389
      %v1421 = vmul.f32 %v925, %v1391
      %v1422 = vmul.f32 %v930, %v1393
      %v1423 = vmul.f32 %v935, %v1395
      %v1424 = vmul.f32 %v940, %v1397
      %v1425 = vmul.f32 %v945, %v1399
      %v1426 = vmul.f32 %v950, %v1401
      %v1427 = vmul.f32 %v955, %v1403
      %v1428 = vmul.f32 %v960, %v1405
      %v1429 = vmul.f32 %v965, %v1407
      %v1430 = vmul.f32 %v970, %v1409
      %v1431 = vmul.f32 %v975, %v1411
      %v1432 = vmul.f32 %v980, %v1413
      %v1433 = vmul.f32 %v985, %v1415
      %v1434 = vmul.f32 %v990, %v1417
      %v1435 = vmul.f32 %v995, %v1419
      %v1436 = vlaneseq
      %v1437 = vshrl.u32 %v1436, 7
      %v1438 = vsub.s32 0, %v1437
      %v1439 = vrot.slane %v1367, %v1438
      %v1440 = vadd.f32 %v1420, %v1439
      %v1441 = vadd.f32 %v1421, %v1439
      %v1442 = vadd.f32 %v1422, %v1439
      %v1443 = vadd.f32 %v1423, %v1439
      %v1444 = vadd.f32 %v1424, %v1439
      %v1445 = vadd.f32 %v1425, %v1439
      %v1446 = vadd.f32 %v1426, %v1439
      %v1447 = vadd.f32 %v1427, %v1439
      %v1448 = vadd.f32 %v1428, %v1439
      %v1449 = vadd.f32 %v1429, %v1439
      %v1450 = vadd.f32 %v1430, %v1439
      %v1451 = vadd.f32 %v1431, %v1439
      %v1452 = vadd.f32 %v1432, %v1439
      %v1453 = vadd.f32 %v1433, %v1439
      %v1454 = vadd.f32 %v1434, %v1439
      %v1455 = vadd.f32 %v1435, %v1439
      %v1456 = vadd.f32 %v1440, %v920
      %v1457 = vadd.f32 %v1441, %v925
      %v1458 = vadd.f32 %v1442, %v930
      %v1459 = vadd.f32 %v1443, %v935
      %v1460 = vadd.f32 %v1444, %v940
      %v1461 = vadd.f32 %v1445, %v945
      %v1462 = vadd.f32 %v1446, %v950
      %v1463 = vadd.f32 %v1447, %v955
      %v1464 = vadd.f32 %v1448, %v960
      %v1465 = vadd.f32 %v1449, %v965
      %v1466 = vadd.f32 %v1450, %v970
      %v1467 = vadd.f32 %v1451, %v975
      %v1468 = vadd.f32 %v1452, %v980
      %v1469 = vadd.f32 %v1453, %v985
      %v1470 = vadd.f32 %v1454, %v990
      %v1471 = vadd.f32 %v1455, %v995
      %v1472 = vld [vmem:[%s2 + $0x1] sm:$0x1]
      %v1473 = vld [vmem:[%s3 + $0x1] sm:$0x1]
      %v1474 = vlaneseq
      %v1475 = vshrl.u32 %v1474, 7
      %v1476 = vsub.s32 0, %v1475
      %v1477 = vrot.slane %v1472, %v1476
      %v1478 = vmul.f32 %v1456, %v1477
      %v1479 = vmul.f32 %v1457, %v1477
      %v1480 = vmul.f32 %v1458, %v1477
      %v1481 = vmul.f32 %v1459, %v1477
      %v1482 = vmul.f32 %v1460, %v1477
      %v1483 = vmul.f32 %v1461, %v1477
      %v1484 = vmul.f32 %v1462, %v1477
      %v1485 = vmul.f32 %v1463, %v1477
      %v1486 = vmul.f32 %v1464, %v1477
      %v1487 = vmul.f32 %v1465, %v1477
      %v1488 = vmul.f32 %v1466, %v1477
      %v1489 = vmul.f32 %v1467, %v1477
      %v1490 = vmul.f32 %v1468, %v1477
      %v1491 = vmul.f32 %v1469, %v1477
      %v1492 = vmul.f32 %v1470, %v1477
      %v1493 = vmul.f32 %v1471, %v1477
      %1494 = vadd.xlane.f32.xlu0 %v1478
      %v1495 = vpop.xlane.xlu0 %1494
      %1496 = vadd.xlane.f32.xlu0 %v1479
      %v1497 = vpop.xlane.xlu0 %1496
      %1498 = vadd.xlane.f32.xlu0 %v1480
      %v1499 = vpop.xlane.xlu0 %1498
      %1500 = vadd.xlane.f32.xlu0 %v1481
      %v1501 = vpop.xlane.xlu0 %1500
      %1502 = vadd.xlane.f32.xlu0 %v1482
      %v1503 = vpop.xlane.xlu0 %1502
      %1504 = vadd.xlane.f32.xlu0 %v1483
      %v1505 = vpop.xlane.xlu0 %1504
      %1506 = vadd.xlane.f32.xlu0 %v1484
      %v1507 = vpop.xlane.xlu0 %1506
      %1508 = vadd.xlane.f32.xlu0 %v1485
      %v1509 = vpop.xlane.xlu0 %1508
      %1510 = vadd.xlane.f32.xlu0 %v1486
      %v1511 = vpop.xlane.xlu0 %1510
      %1512 = vadd.xlane.f32.xlu0 %v1487
      %v1513 = vpop.xlane.xlu0 %1512
      %1514 = vadd.xlane.f32.xlu0 %v1488
      %v1515 = vpop.xlane.xlu0 %1514
      %1516 = vadd.xlane.f32.xlu0 %v1489
      %v1517 = vpop.xlane.xlu0 %1516
      %1518 = vadd.xlane.f32.xlu0 %v1490
      %v1519 = vpop.xlane.xlu0 %1518
      %1520 = vadd.xlane.f32.xlu0 %v1491
      %v1521 = vpop.xlane.xlu0 %1520
      %1522 = vadd.xlane.f32.xlu0 %v1492
      %v1523 = vpop.xlane.xlu0 %1522
      %1524 = vadd.xlane.f32.xlu0 %v1493
      %v1525 = vpop.xlane.xlu0 %1524
      %v1526 = vmul.f32 %v920, %v1495
      %v1527 = vmul.f32 %v925, %v1497
      %v1528 = vmul.f32 %v930, %v1499
      %v1529 = vmul.f32 %v935, %v1501
      %v1530 = vmul.f32 %v940, %v1503
      %v1531 = vmul.f32 %v945, %v1505
      %v1532 = vmul.f32 %v950, %v1507
      %v1533 = vmul.f32 %v955, %v1509
      %v1534 = vmul.f32 %v960, %v1511
      %v1535 = vmul.f32 %v965, %v1513
      %v1536 = vmul.f32 %v970, %v1515
      %v1537 = vmul.f32 %v975, %v1517
      %v1538 = vmul.f32 %v980, %v1519
      %v1539 = vmul.f32 %v985, %v1521
      %v1540 = vmul.f32 %v990, %v1523
      %v1541 = vmul.f32 %v995, %v1525
      %v1542 = vlaneseq
      %v1543 = vshrl.u32 %v1542, 7
      %v1544 = vsub.s32 0, %v1543
      %v1545 = vrot.slane %v1473, %v1544
      %v1546 = vadd.f32 %v1526, %v1545
      %v1547 = vadd.f32 %v1527, %v1545
      %v1548 = vadd.f32 %v1528, %v1545
      %v1549 = vadd.f32 %v1529, %v1545
      %v1550 = vadd.f32 %v1530, %v1545
      %v1551 = vadd.f32 %v1531, %v1545
      %v1552 = vadd.f32 %v1532, %v1545
      %v1553 = vadd.f32 %v1533, %v1545
      %v1554 = vadd.f32 %v1534, %v1545
      %v1555 = vadd.f32 %v1535, %v1545
      %v1556 = vadd.f32 %v1536, %v1545
      %v1557 = vadd.f32 %v1537, %v1545
      %v1558 = vadd.f32 %v1538, %v1545
      %v1559 = vadd.f32 %v1539, %v1545
      %v1560 = vadd.f32 %v1540, %v1545
      %v1561 = vadd.f32 %v1541, %v1545
      %v1562 = vadd.f32 %v1546, %v1456
      %v1563 = vadd.f32 %v1547, %v1457
      %v1564 = vadd.f32 %v1548, %v1458
      %v1565 = vadd.f32 %v1549, %v1459
      %v1566 = vadd.f32 %v1550, %v1460
      %v1567 = vadd.f32 %v1551, %v1461
      %v1568 = vadd.f32 %v1552, %v1462
      %v1569 = vadd.f32 %v1553, %v1463
      %v1570 = vadd.f32 %v1554, %v1464
      %v1571 = vadd.f32 %v1555, %v1465
      %v1572 = vadd.f32 %v1556, %v1466
      %v1573 = vadd.f32 %v1557, %v1467
      %v1574 = vadd.f32 %v1558, %v1468
      %v1575 = vadd.f32 %v1559, %v1469
      %v1576 = vadd.f32 %v1560, %v1470
      %v1577 = vadd.f32 %v1561, %v1471
      %v1578 = vld [vmem:[%s2 + $0x2] sm:$0x1]
      %v1579 = vld [vmem:[%s3 + $0x2] sm:$0x1]
      %v1580 = vlaneseq
      %v1581 = vshrl.u32 %v1580, 7
      %v1582 = vsub.s32 0, %v1581
      %v1583 = vrot.slane %v1578, %v1582
      %v1584 = vmul.f32 %v1562, %v1583
      %v1585 = vmul.f32 %v1563, %v1583
      %v1586 = vmul.f32 %v1564, %v1583
      %v1587 = vmul.f32 %v1565, %v1583
      %v1588 = vmul.f32 %v1566, %v1583
      %v1589 = vmul.f32 %v1567, %v1583
      %v1590 = vmul.f32 %v1568, %v1583
      %v1591 = vmul.f32 %v1569, %v1583
      %v1592 = vmul.f32 %v1570, %v1583
      %v1593 = vmul.f32 %v1571, %v1583
      %v1594 = vmul.f32 %v1572, %v1583
      %v1595 = vmul.f32 %v1573, %v1583
      %v1596 = vmul.f32 %v1574, %v1583
      %v1597 = vmul.f32 %v1575, %v1583
      %v1598 = vmul.f32 %v1576, %v1583
      %v1599 = vmul.f32 %v1577, %v1583
      %1600 = vadd.xlane.f32.xlu0 %v1584
      %v1601 = vpop.xlane.xlu0 %1600
      %1602 = vadd.xlane.f32.xlu0 %v1585
      %v1603 = vpop.xlane.xlu0 %1602
      %1604 = vadd.xlane.f32.xlu0 %v1586
      %v1605 = vpop.xlane.xlu0 %1604
      %1606 = vadd.xlane.f32.xlu0 %v1587
      %v1607 = vpop.xlane.xlu0 %1606
      %1608 = vadd.xlane.f32.xlu0 %v1588
      %v1609 = vpop.xlane.xlu0 %1608
      %1610 = vadd.xlane.f32.xlu0 %v1589
      %v1611 = vpop.xlane.xlu0 %1610
      %1612 = vadd.xlane.f32.xlu0 %v1590
      %v1613 = vpop.xlane.xlu0 %1612
      %1614 = vadd.xlane.f32.xlu0 %v1591
      %v1615 = vpop.xlane.xlu0 %1614
      %1616 = vadd.xlane.f32.xlu0 %v1592
      %v1617 = vpop.xlane.xlu0 %1616
      %1618 = vadd.xlane.f32.xlu0 %v1593
      %v1619 = vpop.xlane.xlu0 %1618
      %1620 = vadd.xlane.f32.xlu0 %v1594
      %v1621 = vpop.xlane.xlu0 %1620
      %1622 = vadd.xlane.f32.xlu0 %v1595
      %v1623 = vpop.xlane.xlu0 %1622
      %1624 = vadd.xlane.f32.xlu0 %v1596
      %v1625 = vpop.xlane.xlu0 %1624
      %1626 = vadd.xlane.f32.xlu0 %v1597
      %v1627 = vpop.xlane.xlu0 %1626
      %1628 = vadd.xlane.f32.xlu0 %v1598
      %v1629 = vpop.xlane.xlu0 %1628
      %1630 = vadd.xlane.f32.xlu0 %v1599
      %v1631 = vpop.xlane.xlu0 %1630
      %v1632 = vmul.f32 %v920, %v1601
      %v1633 = vmul.f32 %v925, %v1603
      %v1634 = vmul.f32 %v930, %v1605
      %v1635 = vmul.f32 %v935, %v1607
      %v1636 = vmul.f32 %v940, %v1609
      %v1637 = vmul.f32 %v945, %v1611
      %v1638 = vmul.f32 %v950, %v1613
      %v1639 = vmul.f32 %v955, %v1615
      %v1640 = vmul.f32 %v960, %v1617
      %v1641 = vmul.f32 %v965, %v1619
      %v1642 = vmul.f32 %v970, %v1621
      %v1643 = vmul.f32 %v975, %v1623
      %v1644 = vmul.f32 %v980, %v1625
      %v1645 = vmul.f32 %v985, %v1627
      %v1646 = vmul.f32 %v990, %v1629
      %v1647 = vmul.f32 %v995, %v1631
      %v1648 = vlaneseq
      %v1649 = vshrl.u32 %v1648, 7
      %v1650 = vsub.s32 0, %v1649
      %v1651 = vrot.slane %v1579, %v1650
      %v1652 = vadd.f32 %v1632, %v1651
      %v1653 = vadd.f32 %v1633, %v1651
      %v1654 = vadd.f32 %v1634, %v1651
      %v1655 = vadd.f32 %v1635, %v1651
      %v1656 = vadd.f32 %v1636, %v1651
      %v1657 = vadd.f32 %v1637, %v1651
      %v1658 = vadd.f32 %v1638, %v1651
      %v1659 = vadd.f32 %v1639, %v1651
      %v1660 = vadd.f32 %v1640, %v1651
      %v1661 = vadd.f32 %v1641, %v1651
      %v1662 = vadd.f32 %v1642, %v1651
      %v1663 = vadd.f32 %v1643, %v1651
      %v1664 = vadd.f32 %v1644, %v1651
      %v1665 = vadd.f32 %v1645, %v1651
      %v1666 = vadd.f32 %v1646, %v1651
      %v1667 = vadd.f32 %v1647, %v1651
      %v1668 = vadd.f32 %v1652, %v1562
      %v1669 = vadd.f32 %v1653, %v1563
      %v1670 = vadd.f32 %v1654, %v1564
      %v1671 = vadd.f32 %v1655, %v1565
      %v1672 = vadd.f32 %v1656, %v1566
      %v1673 = vadd.f32 %v1657, %v1567
      %v1674 = vadd.f32 %v1658, %v1568
      %v1675 = vadd.f32 %v1659, %v1569
      %v1676 = vadd.f32 %v1660, %v1570
      %v1677 = vadd.f32 %v1661, %v1571
      %v1678 = vadd.f32 %v1662, %v1572
      %v1679 = vadd.f32 %v1663, %v1573
      %v1680 = vadd.f32 %v1664, %v1574
      %v1681 = vadd.f32 %v1665, %v1575
      %v1682 = vadd.f32 %v1666, %v1576
      %v1683 = vadd.f32 %v1667, %v1577
      %v1684 = vld [vmem:[%s8] sm:$0x1]
      %v1685 = vld [vmem:[%s9] sm:$0x1]
      %1686 = vmatprep.subr.mxu0 0.0
      %1687 = vmatpush1.xpose.msra.mxu0 %v1350
      %1688 = vmatprep.subr.mxu0 0.0
      %1689 = vmatpush1.xpose.msra.mxu0 %v1351
      %1690 = vmatprep.subr.mxu0 0.0
      %1691 = vmatpush1.xpose.msra.mxu0 %v1352
      %1692 = vmatprep.subr.mxu0 0.0
      %1693 = vmatpush1.xpose.msra.mxu0 %v1353
      %1694 = vmatprep.subr.mxu0 0.0
      %1695 = vmatpush1.xpose.msra.mxu0 %v1354
      %1696 = vmatprep.subr.mxu0 0.0
      %1697 = vmatpush1.xpose.msra.mxu0 %v1355
      %1698 = vmatprep.subr.mxu0 0.0
      %1699 = vmatpush1.xpose.msra.mxu0 %v1356
      %1700 = vmatprep.subr.mxu0 0.0
      %1701 = vmatpush1.xpose.msra.mxu0 %v1357
      %1702 = vmatprep.subr.mxu0 0.0
      %1703 = vmatpush1.xpose.msra.mxu0 %v1358
      %1704 = vmatprep.subr.mxu0 0.0
      %1705 = vmatpush1.xpose.msra.mxu0 %v1359
      %1706 = vmatprep.subr.mxu0 0.0
      %1707 = vmatpush1.xpose.msra.mxu0 %v1360
      %1708 = vmatprep.subr.mxu0 0.0
      %1709 = vmatpush1.xpose.msra.mxu0 %v1361
      %1710 = vmatprep.subr.mxu0 0.0
      %1711 = vmatpush1.xpose.msra.mxu0 %v1362
      %1712 = vmatprep.subr.mxu0 0.0
      %1713 = vmatpush1.xpose.msra.mxu0 %v1363
      %1714 = vmatprep.subr.mxu0 0.0
      %1715 = vmatpush1.xpose.msra.mxu0 %v1364
      %1716 = vmatprep.subr.mxu0 0.0
      %1717 = vmatpush1.xpose.msra.mxu0 %v1365
      %1718 = vmatprep.subr.mxu0 0.0
      %1719 = vmatpush1.xpose.msra.mxu0 0.0
      %1720 = vmatprep.subr.mxu0 0.0
      %1721 = vmatpush1.xpose.msra.mxu0 0.0
      %1722 = vmatprep.subr.mxu0 0.0
      %1723 = vmatpush1.xpose.msra.mxu0 0.0
      %1724 = vmatprep.subr.mxu0 0.0
      %1725 = vmatpush1.xpose.msra.mxu0 0.0
      %1726 = vmatprep.subr.mxu0 0.0
      %1727 = vmatpush1.xpose.msra.mxu0 0.0
      %1728 = vmatprep.subr.mxu0 0.0
      %1729 = vmatpush1.xpose.msra.mxu0 0.0
      %1730 = vmatprep.subr.mxu0 0.0
      %1731 = vmatpush1.xpose.msra.mxu0 0.0
      %1732 = vmatprep.subr.mxu0 0.0
      %1733 = vmatpush1.xpose.msra.mxu0 0.0
      %1734 = vmatprep.subr.mxu0 0.0
      %1735 = vmatpush1.xpose.msra.mxu0 0.0
      %1736 = vmatprep.subr.mxu0 0.0
      %1737 = vmatpush1.xpose.msra.mxu0 0.0
      %1738 = vmatprep.subr.mxu0 0.0
      %1739 = vmatpush1.xpose.msra.mxu0 0.0
      %1740 = vmatprep.subr.mxu0 0.0
      %1741 = vmatpush1.xpose.msra.mxu0 0.0
      %1742 = vmatprep.subr.mxu0 0.0
      %1743 = vmatpush1.xpose.msra.mxu0 0.0
      %1744 = vmatprep.subr.mxu0 0.0
      %1745 = vmatpush1.xpose.msra.mxu0 0.0
      %1746 = vmatprep.subr.mxu0 0.0
      %1747 = vmatpush1.xpose.msra.mxu0 0.0
      %1748 = vmatprep.subr.mxu0 0.0
      %1749 = vmatpush1.xpose.msra.mxu0 0.0
      %1750 = vmatprep.mubr.f32.mxu0 0.0
      %1751 = vmatmul.mubr.f32.gmra.mrb[0].mxu0 %v1685
      %v1752 = vpop.f32.mrb[0].mxu0
      %v1753 = vadd.f32 0.0, %v1752
      %v1754 = vpop.f32.mrb[0].mxu0
      %1755 = vdwg.mxu0
      %1756 = vmatprep.subr.mxu0 0.0
      %1757 = vmatpush1.xpose.msra.mxu0 %v1668
      %1758 = vmatprep.subr.mxu0 0.0
      %1759 = vmatpush1.xpose.msra.mxu0 %v1669
      %1760 = vmatprep.subr.mxu0 0.0
      %1761 = vmatpush1.xpose.msra.mxu0 %v1670
      %1762 = vmatprep.subr.mxu0 0.0
      %1763 = vmatpush1.xpose.msra.mxu0 %v1671
      %1764 = vmatprep.subr.mxu0 0.0
      %1765 = vmatpush1.xpose.msra.mxu0 %v1672
      %1766 = vmatprep.subr.mxu0 0.0
      %1767 = vmatpush1.xpose.msra.mxu0 %v1673
      %1768 = vmatprep.subr.mxu0 0.0
      %1769 = vmatpush1.xpose.msra.mxu0 %v1674
      %1770 = vmatprep.subr.mxu0 0.0
      %1771 = vmatpush1.xpose.msra.mxu0 %v1675
      %1772 = vmatprep.subr.mxu0 0.0
      %1773 = vmatpush1.xpose.msra.mxu0 %v1676
      %1774 = vmatprep.subr.mxu0 0.0
      %1775 = vmatpush1.xpose.msra.mxu0 %v1677
      %1776 = vmatprep.subr.mxu0 0.0
      %1777 = vmatpush1.xpose.msra.mxu0 %v1678
      %1778 = vmatprep.subr.mxu0 0.0
      %1779 = vmatpush1.xpose.msra.mxu0 %v1679
      %1780 = vmatprep.subr.mxu0 0.0
      %1781 = vmatpush1.xpose.msra.mxu0 %v1680
      %1782 = vmatprep.subr.mxu0 0.0
      %1783 = vmatpush1.xpose.msra.mxu0 %v1681
      %1784 = vmatprep.subr.mxu0 0.0
      %1785 = vmatpush1.xpose.msra.mxu0 %v1682
      %1786 = vmatprep.subr.mxu0 0.0
      %1787 = vmatpush1.xpose.msra.mxu0 %v1683
      %1788 = vmatprep.subr.mxu0 0.0
      %1789 = vmatpush1.xpose.msra.mxu0 0.0
      %1790 = vmatprep.subr.mxu0 0.0
      %1791 = vmatpush1.xpose.msra.mxu0 0.0
      %1792 = vmatprep.subr.mxu0 0.0
      %1793 = vmatpush1.xpose.msra.mxu0 0.0
      %1794 = vmatprep.subr.mxu0 0.0
      %1795 = vmatpush1.xpose.msra.mxu0 0.0
      %1796 = vmatprep.subr.mxu0 0.0
      %1797 = vmatpush1.xpose.msra.mxu0 0.0
      %1798 = vmatprep.subr.mxu0 0.0
      %1799 = vmatpush1.xpose.msra.mxu0 0.0
      %1800 = vmatprep.subr.mxu0 0.0
      %1801 = vmatpush1.xpose.msra.mxu0 0.0
      %1802 = vmatprep.subr.mxu0 0.0
      %1803 = vmatpush1.xpose.msra.mxu0 0.0
      %1804 = vmatprep.subr.mxu0 0.0
      %1805 = vmatpush1.xpose.msra.mxu0 0.0
      %1806 = vmatprep.subr.mxu0 0.0
      %1807 = vmatpush1.xpose.msra.mxu0 0.0
      %1808 = vmatprep.subr.mxu0 0.0
      %1809 = vmatpush1.xpose.msra.mxu0 0.0
      %1810 = vmatprep.subr.mxu0 0.0
      %1811 = vmatpush1.xpose.msra.mxu0 0.0
      %1812 = vmatprep.subr.mxu0 0.0
      %1813 = vmatpush1.xpose.msra.mxu0 0.0
      %1814 = vmatprep.subr.mxu0 0.0
      %1815 = vmatpush1.xpose.msra.mxu0 0.0
      %1816 = vmatprep.subr.mxu0 0.0
      %1817 = vmatpush1.xpose.msra.mxu0 0.0
      %1818 = vmatprep.subr.mxu0 0.0
      %1819 = vmatpush1.xpose.msra.mxu0 0.0
      %1820 = vmatprep.mubr.f32.mxu0 0.0
      %1821 = vmatmul.mubr.f32.gmra.mrb[0].mxu0 %v1684
      %v1822 = vpop.f32.mrb[0].mxu0
      %v1823 = vadd.f32 %v1753, %v1822
      %v1824 = vpop.f32.mrb[0].mxu0
      %1825 = vdwg.mxu0
      %v1826 = vld [vmem:[#allocation2] sm:$0x1]
      %1828 = vset.pattern.permute.xlu0 0
      %1829 = vperm.xlu0 %1828, %v1826
      %v1830 = vpop.permute.xlu0 %1829
      %v1832 = vlaneseq
      %v1833 = vshrl.u32 %v1832, 7
      %v1834 = vsub.s32 0, %v1833
      %v1835 = vrot.slane %v1830, %v1834
      %v1836 = vadd.f32 %v1823, %v1835
      %v1837 = vxor.u32 %v1836, 2147483648
      %v1838 = vmul.f32 %v1837, 1.442695
      %v1839 = vpow.pop %v1838
      %v1840 = vadd.f32 %v1839, 1.0
      %v1841 = vrcp.pop %v1840
      %v1842 = vmul.f32 1.0, %v1841
      %1843 = vst [vmem:[%s386] sm:$0x1] %v1842
      %p1844 = scmp.lt.s32.totalorder %s24, 2
      %s1845 = scalar_select %p1844, %s24, 2
      %s1846 = scalar_lea.vmem %s11, %s1845
      // Predicated region
      $region65: #{dcn_forward.1} parent=63 // pred_check
        %p1847 = pneg %p278
      $region66: #{dcn_forward.1} parent=63 // pred_check_branch
        %1849 = sbr.rel (%p1847) target = $region68
      $region67: #{dcn_forward.1} parent=63 // pred_region
        _
      $region68: #{dcn_forward.1} parent=63 // pred_fallthru
        _
    $region64: #{dcn_forward.1} parent=5 // pred_fallthru
      _
    %p1850 = scmp.le.s32.totalorder 2, %s19
    // Predicated region
    $region69: #{dcn_forward.1} parent=5 // pred_check
      %p1851 = pneg %p1850
    $region70: #{dcn_forward.1} parent=5 // pred_check_branch
      %1853 = sbr.rel (%p1851) target = $region72
    $region71: #{dcn_forward.1} parent=5 // pred_region
      %s1854 = ssub.s32 %s19, 2
      // Predicated region
      $region73: #{dcn_forward.1} parent=71 // pred_check
        %p1855 = pneg %p284
      $region74: #{dcn_forward.1} parent=71 // pred_check_branch
        %1857 = sbr.rel (%p1855) target = $region76
      $region75: #{dcn_forward.1} parent=71 // pred_region
        %p1858 = scmp.lt.s32.totalorder %s25, 2
        %s1859 = scalar_select %p1858, %s25, 2
        %s1860 = scalar_lea.vmem %s11, %s1859
      $region76: #{dcn_forward.1} parent=71 // pred_fallthru
        _
    $region72: #{dcn_forward.1} parent=5 // pred_fallthru
      _
  $region6: #{dcn_forward.1} parent=0 // loop_footer
    %s23 = sadd.s32 1, %s19
  $region7: #{dcn_forward.1} parent=0 // loop_footer_branch
    %18 = sbr.rel target = $region3
  $region8: #{dcn_forward.1} parent=0 // loop_exit
    _

</llo_original>
